<compile_context>
chip_gen: v7x
topology: tpu7x:2x2x1
jax: 0.10.0
libtpu: 0.0.40
codegen_flags: <defaults>
</compile_context>

<pallas_src>
import functools
from math import pi as PI

import numpy as np
import jax
import jax.numpy as jnp
from jax.experimental import pallas as pl
from jax.experimental.pallas import tpu as pltpu

LOG2 = float(np.log(2.0))


def _ssp(x):
    # shifted softplus: log(1 + exp(x)) - log(2)  (numerically stable)
    return jnp.maximum(x, 0.0) + jnp.log(1.0 + jnp.exp(-jnp.abs(x))) - LOG2


# ----------------------------------------------------------------------------
# Pallas kernel: the whole forward (all T interaction blocks) in one invocation
# ----------------------------------------------------------------------------
def schnet_kernel(
    pos0_ref, h0_ref, prowcol_ref, prowT_ref, pcolT_ref,
    invdeg_ref, offset_ref, wp_ref, wslab_ref, we_ref, wf_ref, wh_ref,
    pos_out_ref, h_out_ref,
    *, coeff, cutoff, E, F, H, T,
):
    pos = pos0_ref[...]                      # (N, 3)  f32, loop-carried
    h = h0_ref[...]                          # (N, H)  f32, loop-carried
    prowcol = prowcol_ref[...]               # (2E, N) bf16 fused gather one-hots
    prowT = prowT_ref[...]                   # (N, E)  bf16 scatter (by row)
    pcolT = pcolT_ref[...]                   # (N, E)  bf16 scatter (by col)
    invdeg = invdeg_ref[...]                 # (N, 1)  f32 (1/deg, hoisted)
    wp = wp_ref[...]                         # (3, Wp) f32 (pos -> slab columns)

    ea = None                                # (E, G) GaussianSmearing, frozen at t==0
    C = None                                 # (E, 1) cosine cutoff,    frozen at t==0

    # T is small and static -> unrolled in-kernel loop (no per-step grid/DMA
    # overhead; weights are resident full stacks, indexed with a static t).
    for t in range(T):
        # ---- fused per-node projections -> one bf16 gather slab -------------
        # slab columns: [ h@lin1 (F) | pos (3) | h@cw_hr (1) | h@cw_hc (1) | pad ]
        slab = (jnp.dot(pos, wp, preferred_element_type=jnp.float32)
                + jnp.dot(h, wslab_ref[t], preferred_element_type=jnp.float32)
                ).astype(jnp.bfloat16)                                    # (N, Wp)

        # ---- single fused row+col gather: one bf16 MXU pass over (2E, N) ----
        g = jnp.dot(prowcol, slab, preferred_element_type=jnp.float32)   # (2E, Wp)
        gr = g[:E]                            # E % 8 == 0 -> sublane-aligned split
        gc = g[E:]
        xj = gr[:, :F]                        # x[row]
        posr = gr[:, F:F + 3]                 # pos[row]
        hr1 = gr[:, F + 3:F + 4]              # (h @ cw_hr)[row]
        poscl = gc[:, F:F + 3]                # pos[col]
        hc1 = gc[:, F + 4:F + 5]              # (h @ cw_hc)[col]

        if t == 0:
            # loop-invariant edge quantities from the already-gathered positions
            dvec = posr - poscl
            ew = jnp.sqrt(jnp.sum(dvec * dvec, axis=-1, keepdims=True))   # (E, 1)
            d = ew - offset_ref[...]                                      # (E, G)
            ea = jnp.exp(coeff * d * d)                                   # GaussianSmearing
            C = 0.5 * (jnp.cos(ew * (PI / cutoff)) + 1.0)                 # cosine cutoff

        # ---- fused edge projection: ea @ [mlp_w1 | cw_ea] + [mlp_b1 | coord_b]
        we_t = we_ref[t]                                                  # (G+1, F+1)
        eap = jnp.dot(ea, we_t[:-1], preferred_element_type=jnp.float32) + we_t[-1:]

        # ---- coordinate update (scatter-mean over row), bf16 scatter --------
        cu = eap[:, F:F + 1] + hr1 + hc1                                  # (E, 1)
        aggr_e = ((posr - poscl) * cu).astype(jnp.bfloat16)               # (E, 3)
        aggr = jnp.dot(prowT, aggr_e, preferred_element_type=jnp.float32)  # (N, 3)
        pos = pos + aggr * invdeg

        # ---- interaction block (CFConv + act + lin), residual, bf16 scatter -
        wf_t = wf_ref[t]                                                  # (F+1, F)
        w = _ssp(eap[:, :F])                                              # bias folded in
        w = (jnp.dot(w, wf_t[:F], preferred_element_type=jnp.float32)
             + wf_t[F:F + 1]) * C                                         # (E, F)
        msg = (xj * w).astype(jnp.bfloat16)                               # x_j * W
        agg = jnp.dot(pcolT, msg, preferred_element_type=jnp.float32)     # (N, F)
        wh_t = wh_ref[t]                                                  # (F+8+H+1, H)
        out = jnp.dot(agg, wh_t[:F], preferred_element_type=jnp.float32) + wh_t[F:F + 1]
        out = _ssp(out)
        out = (jnp.dot(out, wh_t[F + 8:F + 8 + H],
                       preferred_element_type=jnp.float32)
               + wh_t[F + 8 + H:F + 9 + H])
        h = h + out

    pos_out_ref[...] = pos
    h_out_ref[...] = h


# ----------------------------------------------------------------------------
# Wrapper (glue): one-hot matrices, packed weight slabs, pallas_call
# ----------------------------------------------------------------------------
def _pick_vmem_limit_bytes():
    """~48 MiB on 64-MiB-VMEM parts (v7x), ~100 MiB on 128-MiB parts (v5e/v6e)."""
    cap = 64 * 1024 * 1024
    try:
        cap = int(pltpu.get_tpu_info().vmem_capacity_bytes)
    except Exception:
        pass
    return int(max(32 * 1024 * 1024, min(cap - 16 * 1024 * 1024, 100 * 1024 * 1024)))


def schnet_forward(z, pos, edge_index, params, *, cutoff, num_gaussians):
    N, H = z.shape
    E = edge_index.shape[1]
    T, _, F = params["lin1_w"].shape
    G = num_gaussians
    Wp = ((F + 5 + 7) // 8) * 8                  # fused gather-slab width, lane pad x8

    row, col = edge_index[0], edge_index[1]
    # one-hot gather/scatter matrices; 0/1 are exact in bf16 -> bf16 MXU path
    prow = jax.nn.one_hot(row, N, dtype=jnp.bfloat16)        # (E, N)
    pcol = jax.nn.one_hot(col, N, dtype=jnp.bfloat16)        # (E, N)
    prowcol = jnp.concatenate([prow, pcol], axis=0)          # (2E, N) fused gather
    prowT, pcolT = prow.T, pcol.T                            # (N, E)  bf16 scatters
    deg = jnp.zeros((N,), jnp.float32).at[row].add(1.0)
    inv_deg = (1.0 / jnp.maximum(deg, 1.0))[:, None]         # (N, 1), hoisted

    spacing = cutoff / (num_gaussians - 1)
    coeff = -0.5 / (spacing ** 2)
    offset = jnp.linspace(0.0, cutoff, num_gaussians, dtype=jnp.float32).reshape(1, -1)

    # split coord_update weight according to cat([edge_attr, h[row], h[col]])
    cw = params["coord_w"]
    cw_ea, cw_hr, cw_hc = cw[:, :G, :], cw[:, G:G + H, :], cw[:, G + H:, :]

    # ---- packed weight slabs (4 stacked operands instead of 10) -------------
    # node slab:   slab = pos @ wp + h @ wslab  -> [h@lin1 | pos | h@cw_hr | h@cw_hc]
    wslab = jnp.zeros((T, H, Wp), jnp.float32)
    wslab = wslab.at[:, :, :F].set(params["lin1_w"])
    wslab = wslab.at[:, :, F + 3:F + 4].set(cw_hr)
    wslab = wslab.at[:, :, F + 4:F + 5].set(cw_hc)
    wp = jnp.zeros((3, Wp), jnp.float32).at[:, F:F + 3].set(jnp.eye(3, dtype=jnp.float32))
    # edge slab:   eap = ea @ [mlp_w1 | cw_ea] + [mlp_b1 | coord_b]
    we = jnp.zeros((T, G + 1, F + 1), jnp.float32)
    we = we.at[:, :G, :F].set(params["mlp_w1"])
    we = we.at[:, :G, F:F + 1].set(cw_ea)
    we = we.at[:, G:, :F].set(params["mlp_b1"])
    we = we.at[:, G:, F:F + 1].set(params["coord_b"])
    # filter slab: [mlp_w2 ; mlp_b2]
    wf = jnp.concatenate([params["mlp_w2"], params["mlp_b2"]], axis=1)     # (T, F+1, F)
    # node-output slab: [lin2_w ; lin2_b ; pad to F+8 ; lin_w ; lin_b] (sublane aligned)
    wh = jnp.zeros((T, F + 8 + H + 1, H), jnp.float32)
    wh = wh.at[:, :F].set(params["lin2_w"])
    wh = wh.at[:, F:F + 1].set(params["lin2_b"])
    wh = wh.at[:, F + 8:F + 8 + H].set(params["lin_w"])
    wh = wh.at[:, F + 8 + H:].set(params["lin_b"])

    inputs = (pos, z, prowcol, prowT, pcolT, inv_deg, offset, wp, wslab, we, wf, wh)

    # advisory cost estimate for the XLA scheduler
    mm = (2 * (2 * E) * N * Wp                       # fused gather
          + 2 * N * E * (3 + F)                      # bf16 scatters
          + 2 * E * ((G + 1) * (F + 1) + F * F)      # per-edge filter MLP + coord proj
          + 2 * N * ((3 + H) * Wp + F * H + H * H))  # per-node linears
    flops = T * mm
    transcendentals = T * (E * F + N * H) + E * (G + 1)
    bytes_accessed = sum(int(np.prod(a.shape)) * a.dtype.itemsize for a in inputs) \
        + (N * 3 + N * H) * 4

    vm = pl.BlockSpec(memory_space=pltpu.MemorySpace.VMEM)   # single-buffered, whole array
    kern = functools.partial(schnet_kernel, coeff=float(coeff), cutoff=float(cutoff),
                             E=E, F=F, H=H, T=T)
    pos_out, h_out = pl.pallas_call(
        kern,
        out_shape=[jax.ShapeDtypeStruct((N, 3), jnp.float32),
                   jax.ShapeDtypeStruct((N, H), jnp.float32)],
        in_specs=[vm] * len(inputs),
        out_specs=[vm, vm],
        input_output_aliases={0: 0, 1: 1},                   # pos -> pos_out, z -> h_out
        cost_estimate=pl.CostEstimate(flops=int(flops),
                                      transcendentals=int(transcendentals),
                                      bytes_accessed=int(bytes_accessed)),
        compiler_params=pltpu.CompilerParams(
            vmem_limit_bytes=_pick_vmem_limit_bytes()),
    )(*inputs)
    return pos_out, h_out


# ----------------------------------------------------------------------------
# Pure-JAX reference (same math, index-based gather/scatter, all f32)
# ----------------------------------------------------------------------------
def schnet_ref(z, pos, edge_index, params, *, cutoff, num_gaussians):
    N, H = z.shape
    T, G, F = params["mlp_w1"].shape
    row, col = edge_index[0], edge_index[1]

    spacing = cutoff / (num_gaussians - 1)
    coeff = -0.5 / (spacing ** 2)
    offset = jnp.linspace(0.0, cutoff, num_gaussians, dtype=jnp.float32)

    h = z
    ew = jnp.linalg.norm(pos[row] - pos[col], axis=-1)                    # (E,)
    ea = jnp.exp(coeff * (ew[:, None] - offset[None, :]) ** 2)            # (E, G)

    for t in range(T):
        cat = jnp.concatenate([ea, h[row], h[col]], axis=-1)
        cu = cat @ params["coord_w"][t] + params["coord_b"][t]            # (E, 1)
        aggr_e = (pos[row] - pos[col]) * cu
        s = jnp.zeros((N, 3), jnp.float32).at[row].add(aggr_e)
        cnt = jnp.zeros((N,), jnp.float32).at[row].add(1.0)
        pos = pos + s / jnp.maximum(cnt, 1.0)[:, None]

        C = (0.5 * (jnp.cos(ew * PI / cutoff) + 1.0))[:, None]
        w = _ssp(ea @ params["mlp_w1"][t] + params["mlp_b1"][t])
        w = (w @ params["mlp_w2"][t] + params["mlp_b2"][t]) * C
        x = h @ params["lin1_w"][t]
        msg = x[row] * w
        agg = jnp.zeros((N, F), jnp.float32).at[col].add(msg)
        out = agg @ params["lin2_w"][t] + params["lin2_b"][t]
        out = _ssp(out)
        out = out @ params["lin_w"][t] + params["lin_b"][t]
        h = h + out
    return pos, h


# ----------------------------------------------------------------------------
# Deterministic parameter init (xavier-uniform weights, zero biases, as in torch)
# ----------------------------------------------------------------------------
def init_params(key, T, H, F, G):
    def xavier(k, shape):
        fan_in, fan_out = shape[-2], shape[-1]
        bound = float(np.sqrt(6.0 / (fan_in + fan_out)))
        return jax.random.uniform(k, shape, jnp.float32, -bound, bound)

    ks = jax.random.split(key, 8)
    return {
        "mlp_w1": xavier(ks[0], (T, G, F)),
        "mlp_b1": jnp.zeros((T, 1, F), jnp.float32),
        "mlp_w2": xavier(ks[1], (T, F, F)),
        "mlp_b2": jnp.zeros((T, 1, F), jnp.float32),
        "lin1_w": xavier(ks[2], (T, H, F)),
        "lin2_w": xavier(ks[3], (T, F, H)),
        "lin2_b": jnp.zeros((T, 1, H), jnp.float32),
        "lin_w":  xavier(ks[4], (T, H, H)),
        "lin_b":  jnp.zeros((T, 1, H), jnp.float32),
        "coord_w": xavier(ks[5], (T, G + 2 * H, 1)),
        "coord_b": 0.1 * jax.random.normal(ks[6], (T, 1, 1), jnp.float32),
    }


if __name__ == "__main__":
    # small synthetic graph: N atoms with H-dim node features (FastSchNet passes
    # features as `z`), E directed edges.
    N, E, H, F, G, T = 8, 16, 32, 32, 16, 2
    cutoff = 10.0

    key = jax.random.PRNGKey(0)
    k_z, k_pos, k_row, k_col, k_par = jax.random.split(key, 5)
    z = jax.random.normal(k_z, (N, H), jnp.float32)
    pos = jax.random.normal(k_pos, (N, 3), jnp.float32)
    row = jax.random.randint(k_row, (E,), 0, N)
    col = jax.random.randint(k_col, (E,), 0, N)
    edge_index = jnp.stack([row, col])
    params = init_params(k_par, T, H, F, G)

    # reference first (pos/z are aliased into the kernel outputs)
    pos_ref, h_ref = schnet_ref(z, pos, edge_index, params,
                                cutoff=cutoff, num_gaussians=G)

    pos_out, h_out = schnet_forward(z, pos, edge_index, params,
                                    cutoff=cutoff, num_gaussians=G)
    jax.block_until_ready((pos_out, h_out))

    # Gathers, scatters and the edge-distance derivation all run on the bf16
    # MXU path (one-hot weights are exact; the gathered node slab and the
    # scattered message/coord tensors are bf16-rounded), so compare against
    # the pure-f32 reference with correspondingly relaxed tolerances.
    np.testing.assert_allclose(np.asarray(pos_out), np.asarray(pos_ref),
                               rtol=6e-2, atol=1.2e-1)
    np.testing.assert_allclose(np.asarray(h_out), np.asarray(h_ref),
                               rtol=6e-2, atol=1.2e-1)

    print("KERNEL_OK")
</pallas_src>

<mosaic_0001>
module attributes {stable_mosaic.version = 11 : i64} {
  func.func @schnet_kernel(%arg0: memref<8x3xf32, #tpu.memory_space<vmem>>, %arg1: memref<8x32xf32, #tpu.memory_space<vmem>>, %arg2: memref<32x8xbf16, #tpu.memory_space<vmem>>, %arg3: memref<8x16xbf16, #tpu.memory_space<vmem>>, %arg4: memref<8x16xbf16, #tpu.memory_space<vmem>>, %arg5: memref<8x1xf32, #tpu.memory_space<vmem>>, %arg6: memref<1x16xf32, #tpu.memory_space<vmem>>, %arg7: memref<3x40xf32, #tpu.memory_space<vmem>>, %arg8: memref<2x32x40xf32, #tpu.memory_space<vmem>>, %arg9: memref<2x17x33xf32, #tpu.memory_space<vmem>>, %arg10: memref<2x33x32xf32, #tpu.memory_space<vmem>>, %arg11: memref<2x73x32xf32, #tpu.memory_space<vmem>>, %arg12: memref<8x3xf32, #tpu.memory_space<vmem>>, %arg13: memref<8x32xf32, #tpu.memory_space<vmem>>) attributes {dimension_semantics = [], scalar_prefetch = 0 : i64, scratch_operands = 0 : i64, tpu.core_type = #tpu.core_type<tc>} {
    %c0 = arith.constant 0 : index
    %c0_0 = arith.constant 0 : index
    %0 = vector.load %arg0[%c0, %c0_0] : memref<8x3xf32, #tpu.memory_space<vmem>>, vector<8x3xf32>
    %c0_1 = arith.constant 0 : index
    %c0_2 = arith.constant 0 : index
    %1 = vector.load %arg1[%c0_1, %c0_2] : memref<8x32xf32, #tpu.memory_space<vmem>>, vector<8x32xf32>
    %c0_3 = arith.constant 0 : index
    %c0_4 = arith.constant 0 : index
    %2 = vector.load %arg2[%c0_3, %c0_4] : memref<32x8xbf16, #tpu.memory_space<vmem>>, vector<32x8xbf16>
    %c0_5 = arith.constant 0 : index
    %c0_6 = arith.constant 0 : index
    %3 = vector.load %arg3[%c0_5, %c0_6] : memref<8x16xbf16, #tpu.memory_space<vmem>>, vector<8x16xbf16>
    %c0_7 = arith.constant 0 : index
    %c0_8 = arith.constant 0 : index
    %4 = vector.load %arg4[%c0_7, %c0_8] : memref<8x16xbf16, #tpu.memory_space<vmem>>, vector<8x16xbf16>
    %c0_9 = arith.constant 0 : index
    %c0_10 = arith.constant 0 : index
    %5 = vector.load %arg5[%c0_9, %c0_10] : memref<8x1xf32, #tpu.memory_space<vmem>>, vector<8x1xf32>
    %c0_11 = arith.constant 0 : index
    %c0_12 = arith.constant 0 : index
    %6 = vector.load %arg7[%c0_11, %c0_12] : memref<3x40xf32, #tpu.memory_space<vmem>>, vector<3x40xf32>
    %cst = arith.constant dense<0.000000e+00> : vector<8x40xf32>
    %7 = tpu.matmul %0, %6, %cst {dimension_numbers = #tpu.dot_dimension_numbers<[1], [0], [0], [1], [0, 0, 1, 1], [], []>} : vector<8x3xf32>, vector<3x40xf32>, vector<8x40xf32> -> vector<8x40xf32>
    %c0_13 = arith.constant 0 : index
    %c0_14 = arith.constant 0 : index
    %c0_15 = arith.constant 0 : index
    %8 = vector.load %arg8[%c0_13, %c0_14, %c0_15] : memref<2x32x40xf32, #tpu.memory_space<vmem>>, vector<1x32x40xf32>
    %9 = vector.shape_cast %8 : vector<1x32x40xf32> to vector<32x40xf32>
    %cst_16 = arith.constant dense<0.000000e+00> : vector<8x40xf32>
    %10 = tpu.matmul %1, %9, %cst_16 {dimension_numbers = #tpu.dot_dimension_numbers<[1], [0], [0], [1], [0, 0, 1, 1], [], []>} : vector<8x32xf32>, vector<32x40xf32>, vector<8x40xf32> -> vector<8x40xf32>
    %11 = arith.addf %7, %10 : vector<8x40xf32>
    %12 = arith.truncf %11 : vector<8x40xf32> to vector<8x40xbf16>
    %cst_17 = arith.constant dense<0.000000e+00> : vector<32x40xf32>
    %13 = tpu.matmul %2, %12, %cst_17 {dimension_numbers = #tpu.dot_dimension_numbers<[1], [0], [0], [1], [0, 0, 1, 1], [], []>} : vector<32x8xbf16>, vector<8x40xbf16>, vector<32x40xf32> -> vector<32x40xf32>
    %14 = vector.extract_strided_slice %13 {offsets = [0, 0], sizes = [16, 40], strides = [1, 1]} : vector<32x40xf32> to vector<16x40xf32>
    %15 = vector.extract_strided_slice %13 {offsets = [16, 0], sizes = [16, 40], strides = [1, 1]} : vector<32x40xf32> to vector<16x40xf32>
    %16 = vector.extract_strided_slice %14 {offsets = [0, 0], sizes = [16, 32], strides = [1, 1]} : vector<16x40xf32> to vector<16x32xf32>
    %17 = vector.extract_strided_slice %14 {offsets = [0, 32], sizes = [16, 3], strides = [1, 1]} : vector<16x40xf32> to vector<16x3xf32>
    %18 = vector.extract_strided_slice %14 {offsets = [0, 35], sizes = [16, 1], strides = [1, 1]} : vector<16x40xf32> to vector<16x1xf32>
    %19 = vector.extract_strided_slice %15 {offsets = [0, 32], sizes = [16, 3], strides = [1, 1]} : vector<16x40xf32> to vector<16x3xf32>
    %20 = vector.extract_strided_slice %15 {offsets = [0, 36], sizes = [16, 1], strides = [1, 1]} : vector<16x40xf32> to vector<16x1xf32>
    %21 = arith.subf %17, %19 : vector<16x3xf32>
    %22 = arith.mulf %21, %21 : vector<16x3xf32>
    %cst_18 = arith.constant dense<0.000000e+00> : vector<16xf32>
    %23 = vector.multi_reduction <add>, %22, %cst_18 [1] : vector<16x3xf32> to vector<16xf32>
    %24 = vector.shape_cast %23 : vector<16xf32> to vector<16x1xf32>
    %25 = math.sqrt %24 : vector<16x1xf32>
    %c0_19 = arith.constant 0 : index
    %c0_20 = arith.constant 0 : index
    %26 = vector.load %arg6[%c0_19, %c0_20] : memref<1x16xf32, #tpu.memory_space<vmem>>, vector<1x16xf32>
    %27 = vector.broadcast %25 : vector<16x1xf32> to vector<16x16xf32>
    %28 = vector.broadcast %26 : vector<1x16xf32> to vector<16x16xf32>
    %29 = arith.subf %27, %28 : vector<16x16xf32>
    %cst_21 = arith.constant -1.125000e+00 : f32
    %30 = vector.broadcast %cst_21 : f32 to vector<16x16xf32>
    %31 = arith.mulf %30, %29 : vector<16x16xf32>
    %32 = arith.mulf %31, %29 : vector<16x16xf32>
    %33 = math.exp %32 : vector<16x16xf32>
    %cst_22 = arith.constant 0.314159274 : f32
    %34 = vector.broadcast %cst_22 : f32 to vector<16x1xf32>
    %35 = arith.mulf %25, %34 : vector<16x1xf32>
    %36 = math.cos %35 : vector<16x1xf32>
    %cst_23 = arith.constant 1.000000e+00 : f32
    %37 = vector.broadcast %cst_23 : f32 to vector<16x1xf32>
    %38 = arith.addf %36, %37 : vector<16x1xf32>
    %cst_24 = arith.constant 5.000000e-01 : f32
    %39 = vector.broadcast %cst_24 : f32 to vector<16x1xf32>
    %40 = arith.mulf %39, %38 : vector<16x1xf32>
    %c0_25 = arith.constant 0 : index
    %c0_26 = arith.constant 0 : index
    %c0_27 = arith.constant 0 : index
    %41 = vector.load %arg9[%c0_25, %c0_26, %c0_27] : memref<2x17x33xf32, #tpu.memory_space<vmem>>, vector<1x17x33xf32>
    %42 = vector.shape_cast %41 : vector<1x17x33xf32> to vector<17x33xf32>
    %43 = vector.extract_strided_slice %42 {offsets = [0, 0], sizes = [16, 33], strides = [1, 1]} : vector<17x33xf32> to vector<16x33xf32>
    %cst_28 = arith.constant dense<0.000000e+00> : vector<16x33xf32>
    %44 = tpu.matmul %33, %43, %cst_28 {dimension_numbers = #tpu.dot_dimension_numbers<[1], [0], [0], [1], [0, 0, 1, 1], [], []>} : vector<16x16xf32>, vector<16x33xf32>, vector<16x33xf32> -> vector<16x33xf32>
    %45 = vector.extract_strided_slice %42 {offsets = [16, 0], sizes = [1, 33], strides = [1, 1]} : vector<17x33xf32> to vector<1x33xf32>
    %46 = vector.broadcast %45 : vector<1x33xf32> to vector<16x33xf32>
    %47 = arith.addf %44, %46 : vector<16x33xf32>
    %48 = vector.extract_strided_slice %47 {offsets = [0, 32], sizes = [16, 1], strides = [1, 1]} : vector<16x33xf32> to vector<16x1xf32>
    %49 = arith.addf %48, %18 : vector<16x1xf32>
    %50 = arith.addf %49, %20 : vector<16x1xf32>
    %51 = arith.subf %17, %19 : vector<16x3xf32>
    %52 = vector.broadcast %50 : vector<16x1xf32> to vector<16x3xf32>
    %53 = arith.mulf %51, %52 : vector<16x3xf32>
    %54 = arith.truncf %53 : vector<16x3xf32> to vector<16x3xbf16>
    %cst_29 = arith.constant dense<0.000000e+00> : vector<8x3xf32>
    %55 = tpu.matmul %3, %54, %cst_29 {dimension_numbers = #tpu.dot_dimension_numbers<[1], [0], [0], [1], [0, 0, 1, 1], [], []>} : vector<8x16xbf16>, vector<16x3xbf16>, vector<8x3xf32> -> vector<8x3xf32>
    %56 = vector.broadcast %5 : vector<8x1xf32> to vector<8x3xf32>
    %57 = arith.mulf %55, %56 : vector<8x3xf32>
    %58 = arith.addf %0, %57 : vector<8x3xf32>
    %c0_30 = arith.constant 0 : index
    %c0_31 = arith.constant 0 : index
    %c0_32 = arith.constant 0 : index
    %59 = vector.load %arg10[%c0_30, %c0_31, %c0_32] : memref<2x33x32xf32, #tpu.memory_space<vmem>>, vector<1x33x32xf32>
    %60 = vector.shape_cast %59 : vector<1x33x32xf32> to vector<33x32xf32>
    %61 = vector.extract_strided_slice %47 {offsets = [0, 0], sizes = [16, 32], strides = [1, 1]} : vector<16x33xf32> to vector<16x32xf32>
    %cst_33 = arith.constant 0.000000e+00 : f32
    %62 = vector.broadcast %cst_33 : f32 to vector<16x32xf32>
    %63 = arith.maximumf %61, %62 : vector<16x32xf32>
    %64 = math.absf %61 : vector<16x32xf32>
    %cst_34 = arith.constant 0.000000e+00 : f32
    %65 = vector.broadcast %cst_34 : f32 to vector<16x32xf32>
    %66 = arith.subf %65, %64 : vector<16x32xf32>
    %67 = math.exp %66 : vector<16x32xf32>
    %cst_35 = arith.constant 1.000000e+00 : f32
    %68 = vector.broadcast %cst_35 : f32 to vector<16x32xf32>
    %69 = arith.addf %68, %67 : vector<16x32xf32>
    %70 = math.log %69 : vector<16x32xf32>
    %71 = arith.addf %63, %70 : vector<16x32xf32>
    %cst_36 = arith.constant 0.693147182 : f32
    %72 = vector.broadcast %cst_36 : f32 to vector<16x32xf32>
    %73 = arith.subf %71, %72 : vector<16x32xf32>
    %74 = vector.extract_strided_slice %60 {offsets = [0, 0], sizes = [32, 32], strides = [1, 1]} : vector<33x32xf32> to vector<32x32xf32>
    %cst_37 = arith.constant dense<0.000000e+00> : vector<16x32xf32>
    %75 = tpu.matmul %73, %74, %cst_37 {dimension_numbers = #tpu.dot_dimension_numbers<[1], [0], [0], [1], [0, 0, 1, 1], [], []>} : vector<16x32xf32>, vector<32x32xf32>, vector<16x32xf32> -> vector<16x32xf32>
    %76 = vector.extract_strided_slice %60 {offsets = [32, 0], sizes = [1, 32], strides = [1, 1]} : vector<33x32xf32> to vector<1x32xf32>
    %77 = vector.broadcast %76 : vector<1x32xf32> to vector<16x32xf32>
    %78 = arith.addf %75, %77 : vector<16x32xf32>
    %79 = vector.broadcast %40 : vector<16x1xf32> to vector<16x32xf32>
    %80 = arith.mulf %78, %79 : vector<16x32xf32>
    %81 = arith.mulf %16, %80 : vector<16x32xf32>
    %82 = arith.truncf %81 : vector<16x32xf32> to vector<16x32xbf16>
    %cst_38 = arith.constant dense<0.000000e+00> : vector<8x32xf32>
    %83 = tpu.matmul %4, %82, %cst_38 {dimension_numbers = #tpu.dot_dimension_numbers<[1], [0], [0], [1], [0, 0, 1, 1], [], []>} : vector<8x16xbf16>, vector<16x32xbf16>, vector<8x32xf32> -> vector<8x32xf32>
    %c0_39 = arith.constant 0 : index
    %c0_40 = arith.constant 0 : index
    %c0_41 = arith.constant 0 : index
    %84 = vector.load %arg11[%c0_39, %c0_40, %c0_41] : memref<2x73x32xf32, #tpu.memory_space<vmem>>, vector<1x73x32xf32>
    %85 = vector.shape_cast %84 : vector<1x73x32xf32> to vector<73x32xf32>
    %86 = vector.extract_strided_slice %85 {offsets = [0, 0], sizes = [32, 32], strides = [1, 1]} : vector<73x32xf32> to vector<32x32xf32>
    %cst_42 = arith.constant dense<0.000000e+00> : vector<8x32xf32>
    %87 = tpu.matmul %83, %86, %cst_42 {dimension_numbers = #tpu.dot_dimension_numbers<[1], [0], [0], [1], [0, 0, 1, 1], [], []>} : vector<8x32xf32>, vector<32x32xf32>, vector<8x32xf32> -> vector<8x32xf32>
    %88 = vector.extract_strided_slice %85 {offsets = [32, 0], sizes = [1, 32], strides = [1, 1]} : vector<73x32xf32> to vector<1x32xf32>
    %89 = vector.broadcast %88 : vector<1x32xf32> to vector<8x32xf32>
    %90 = arith.addf %87, %89 : vector<8x32xf32>
    %cst_43 = arith.constant 0.000000e+00 : f32
    %91 = vector.broadcast %cst_43 : f32 to vector<8x32xf32>
    %92 = arith.maximumf %90, %91 : vector<8x32xf32>
    %93 = math.absf %90 : vector<8x32xf32>
    %cst_44 = arith.constant 0.000000e+00 : f32
    %94 = vector.broadcast %cst_44 : f32 to vector<8x32xf32>
    %95 = arith.subf %94, %93 : vector<8x32xf32>
    %96 = math.exp %95 : vector<8x32xf32>
    %cst_45 = arith.constant 1.000000e+00 : f32
    %97 = vector.broadcast %cst_45 : f32 to vector<8x32xf32>
    %98 = arith.addf %97, %96 : vector<8x32xf32>
    %99 = math.log %98 : vector<8x32xf32>
    %100 = arith.addf %92, %99 : vector<8x32xf32>
    %cst_46 = arith.constant 0.693147182 : f32
    %101 = vector.broadcast %cst_46 : f32 to vector<8x32xf32>
    %102 = arith.subf %100, %101 : vector<8x32xf32>
    %103 = vector.extract_strided_slice %85 {offsets = [40, 0], sizes = [32, 32], strides = [1, 1]} : vector<73x32xf32> to vector<32x32xf32>
    %cst_47 = arith.constant dense<0.000000e+00> : vector<8x32xf32>
    %104 = tpu.matmul %102, %103, %cst_47 {dimension_numbers = #tpu.dot_dimension_numbers<[1], [0], [0], [1], [0, 0, 1, 1], [], []>} : vector<8x32xf32>, vector<32x32xf32>, vector<8x32xf32> -> vector<8x32xf32>
    %105 = vector.extract_strided_slice %85 {offsets = [72, 0], sizes = [1, 32], strides = [1, 1]} : vector<73x32xf32> to vector<1x32xf32>
    %106 = vector.broadcast %105 : vector<1x32xf32> to vector<8x32xf32>
    %107 = arith.addf %104, %106 : vector<8x32xf32>
    %108 = arith.addf %1, %107 : vector<8x32xf32>
    %cst_48 = arith.constant dense<0.000000e+00> : vector<8x40xf32>
    %109 = tpu.matmul %58, %6, %cst_48 {dimension_numbers = #tpu.dot_dimension_numbers<[1], [0], [0], [1], [0, 0, 1, 1], [], []>} : vector<8x3xf32>, vector<3x40xf32>, vector<8x40xf32> -> vector<8x40xf32>
    %c1 = arith.constant 1 : index
    %c0_49 = arith.constant 0 : index
    %c0_50 = arith.constant 0 : index
    %110 = vector.load %arg8[%c1, %c0_49, %c0_50] : memref<2x32x40xf32, #tpu.memory_space<vmem>>, vector<1x32x40xf32>
    %111 = vector.shape_cast %110 : vector<1x32x40xf32> to vector<32x40xf32>
    %cst_51 = arith.constant dense<0.000000e+00> : vector<8x40xf32>
    %112 = tpu.matmul %108, %111, %cst_51 {dimension_numbers = #tpu.dot_dimension_numbers<[1], [0], [0], [1], [0, 0, 1, 1], [], []>} : vector<8x32xf32>, vector<32x40xf32>, vector<8x40xf32> -> vector<8x40xf32>
    %113 = arith.addf %109, %112 : vector<8x40xf32>
    %114 = arith.truncf %113 : vector<8x40xf32> to vector<8x40xbf16>
    %cst_52 = arith.constant dense<0.000000e+00> : vector<32x40xf32>
    %115 = tpu.matmul %2, %114, %cst_52 {dimension_numbers = #tpu.dot_dimension_numbers<[1], [0], [0], [1], [0, 0, 1, 1], [], []>} : vector<32x8xbf16>, vector<8x40xbf16>, vector<32x40xf32> -> vector<32x40xf32>
    %116 = vector.extract_strided_slice %115 {offsets = [0, 0], sizes = [16, 40], strides = [1, 1]} : vector<32x40xf32> to vector<16x40xf32>
    %117 = vector.extract_strided_slice %115 {offsets = [16, 0], sizes = [16, 40], strides = [1, 1]} : vector<32x40xf32> to vector<16x40xf32>
    %118 = vector.extract_strided_slice %116 {offsets = [0, 0], sizes = [16, 32], strides = [1, 1]} : vector<16x40xf32> to vector<16x32xf32>
    %119 = vector.extract_strided_slice %116 {offsets = [0, 32], sizes = [16, 3], strides = [1, 1]} : vector<16x40xf32> to vector<16x3xf32>
    %120 = vector.extract_strided_slice %116 {offsets = [0, 35], sizes = [16, 1], strides = [1, 1]} : vector<16x40xf32> to vector<16x1xf32>
    %121 = vector.extract_strided_slice %117 {offsets = [0, 32], sizes = [16, 3], strides = [1, 1]} : vector<16x40xf32> to vector<16x3xf32>
    %122 = vector.extract_strided_slice %117 {offsets = [0, 36], sizes = [16, 1], strides = [1, 1]} : vector<16x40xf32> to vector<16x1xf32>
    %c1_53 = arith.constant 1 : index
    %c0_54 = arith.constant 0 : index
    %c0_55 = arith.constant 0 : index
    %123 = vector.load %arg9[%c1_53, %c0_54, %c0_55] : memref<2x17x33xf32, #tpu.memory_space<vmem>>, vector<1x17x33xf32>
    %124 = vector.shape_cast %123 : vector<1x17x33xf32> to vector<17x33xf32>
    %125 = vector.extract_strided_slice %124 {offsets = [0, 0], sizes = [16, 33], strides = [1, 1]} : vector<17x33xf32> to vector<16x33xf32>
    %cst_56 = arith.constant dense<0.000000e+00> : vector<16x33xf32>
    %126 = tpu.matmul %33, %125, %cst_56 {dimension_numbers = #tpu.dot_dimension_numbers<[1], [0], [0], [1], [0, 0, 1, 1], [], []>} : vector<16x16xf32>, vector<16x33xf32>, vector<16x33xf32> -> vector<16x33xf32>
    %127 = vector.extract_strided_slice %124 {offsets = [16, 0], sizes = [1, 33], strides = [1, 1]} : vector<17x33xf32> to vector<1x33xf32>
    %128 = vector.broadcast %127 : vector<1x33xf32> to vector<16x33xf32>
    %129 = arith.addf %126, %128 : vector<16x33xf32>
    %130 = vector.extract_strided_slice %129 {offsets = [0, 32], sizes = [16, 1], strides = [1, 1]} : vector<16x33xf32> to vector<16x1xf32>
    %131 = arith.addf %130, %120 : vector<16x1xf32>
    %132 = arith.addf %131, %122 : vector<16x1xf32>
    %133 = arith.subf %119, %121 : vector<16x3xf32>
    %134 = vector.broadcast %132 : vector<16x1xf32> to vector<16x3xf32>
    %135 = arith.mulf %133, %134 : vector<16x3xf32>
    %136 = arith.truncf %135 : vector<16x3xf32> to vector<16x3xbf16>
    %cst_57 = arith.constant dense<0.000000e+00> : vector<8x3xf32>
    %137 = tpu.matmul %3, %136, %cst_57 {dimension_numbers = #tpu.dot_dimension_numbers<[1], [0], [0], [1], [0, 0, 1, 1], [], []>} : vector<8x16xbf16>, vector<16x3xbf16>, vector<8x3xf32> -> vector<8x3xf32>
    %138 = vector.broadcast %5 : vector<8x1xf32> to vector<8x3xf32>
    %139 = arith.mulf %137, %138 : vector<8x3xf32>
    %140 = arith.addf %58, %139 : vector<8x3xf32>
    %c1_58 = arith.constant 1 : index
    %c0_59 = arith.constant 0 : index
    %c0_60 = arith.constant 0 : index
    %141 = vector.load %arg10[%c1_58, %c0_59, %c0_60] : memref<2x33x32xf32, #tpu.memory_space<vmem>>, vector<1x33x32xf32>
    %142 = vector.shape_cast %141 : vector<1x33x32xf32> to vector<33x32xf32>
    %143 = vector.extract_strided_slice %129 {offsets = [0, 0], sizes = [16, 32], strides = [1, 1]} : vector<16x33xf32> to vector<16x32xf32>
    %cst_61 = arith.constant 0.000000e+00 : f32
    %144 = vector.broadcast %cst_61 : f32 to vector<16x32xf32>
    %145 = arith.maximumf %143, %144 : vector<16x32xf32>
    %146 = math.absf %143 : vector<16x32xf32>
    %cst_62 = arith.constant 0.000000e+00 : f32
    %147 = vector.broadcast %cst_62 : f32 to vector<16x32xf32>
    %148 = arith.subf %147, %146 : vector<16x32xf32>
    %149 = math.exp %148 : vector<16x32xf32>
    %cst_63 = arith.constant 1.000000e+00 : f32
    %150 = vector.broadcast %cst_63 : f32 to vector<16x32xf32>
    %151 = arith.addf %150, %149 : vector<16x32xf32>
    %152 = math.log %151 : vector<16x32xf32>
    %153 = arith.addf %145, %152 : vector<16x32xf32>
    %cst_64 = arith.constant 0.693147182 : f32
    %154 = vector.broadcast %cst_64 : f32 to vector<16x32xf32>
    %155 = arith.subf %153, %154 : vector<16x32xf32>
    %156 = vector.extract_strided_slice %142 {offsets = [0, 0], sizes = [32, 32], strides = [1, 1]} : vector<33x32xf32> to vector<32x32xf32>
    %cst_65 = arith.constant dense<0.000000e+00> : vector<16x32xf32>
    %157 = tpu.matmul %155, %156, %cst_65 {dimension_numbers = #tpu.dot_dimension_numbers<[1], [0], [0], [1], [0, 0, 1, 1], [], []>} : vector<16x32xf32>, vector<32x32xf32>, vector<16x32xf32> -> vector<16x32xf32>
    %158 = vector.extract_strided_slice %142 {offsets = [32, 0], sizes = [1, 32], strides = [1, 1]} : vector<33x32xf32> to vector<1x32xf32>
    %159 = vector.broadcast %158 : vector<1x32xf32> to vector<16x32xf32>
    %160 = arith.addf %157, %159 : vector<16x32xf32>
    %161 = vector.broadcast %40 : vector<16x1xf32> to vector<16x32xf32>
    %162 = arith.mulf %160, %161 : vector<16x32xf32>
    %163 = arith.mulf %118, %162 : vector<16x32xf32>
    %164 = arith.truncf %163 : vector<16x32xf32> to vector<16x32xbf16>
    %cst_66 = arith.constant dense<0.000000e+00> : vector<8x32xf32>
    %165 = tpu.matmul %4, %164, %cst_66 {dimension_numbers = #tpu.dot_dimension_numbers<[1], [0], [0], [1], [0, 0, 1, 1], [], []>} : vector<8x16xbf16>, vector<16x32xbf16>, vector<8x32xf32> -> vector<8x32xf32>
    %c1_67 = arith.constant 1 : index
    %c0_68 = arith.constant 0 : index
    %c0_69 = arith.constant 0 : index
    %166 = vector.load %arg11[%c1_67, %c0_68, %c0_69] : memref<2x73x32xf32, #tpu.memory_space<vmem>>, vector<1x73x32xf32>
    %167 = vector.shape_cast %166 : vector<1x73x32xf32> to vector<73x32xf32>
    %168 = vector.extract_strided_slice %167 {offsets = [0, 0], sizes = [32, 32], strides = [1, 1]} : vector<73x32xf32> to vector<32x32xf32>
    %cst_70 = arith.constant dense<0.000000e+00> : vector<8x32xf32>
    %169 = tpu.matmul %165, %168, %cst_70 {dimension_numbers = #tpu.dot_dimension_numbers<[1], [0], [0], [1], [0, 0, 1, 1], [], []>} : vector<8x32xf32>, vector<32x32xf32>, vector<8x32xf32> -> vector<8x32xf32>
    %170 = vector.extract_strided_slice %167 {offsets = [32, 0], sizes = [1, 32], strides = [1, 1]} : vector<73x32xf32> to vector<1x32xf32>
    %171 = vector.broadcast %170 : vector<1x32xf32> to vector<8x32xf32>
    %172 = arith.addf %169, %171 : vector<8x32xf32>
    %cst_71 = arith.constant 0.000000e+00 : f32
    %173 = vector.broadcast %cst_71 : f32 to vector<8x32xf32>
    %174 = arith.maximumf %172, %173 : vector<8x32xf32>
    %175 = math.absf %172 : vector<8x32xf32>
    %cst_72 = arith.constant 0.000000e+00 : f32
    %176 = vector.broadcast %cst_72 : f32 to vector<8x32xf32>
    %177 = arith.subf %176, %175 : vector<8x32xf32>
    %178 = math.exp %177 : vector<8x32xf32>
    %cst_73 = arith.constant 1.000000e+00 : f32
    %179 = vector.broadcast %cst_73 : f32 to vector<8x32xf32>
    %180 = arith.addf %179, %178 : vector<8x32xf32>
    %181 = math.log %180 : vector<8x32xf32>
    %182 = arith.addf %174, %181 : vector<8x32xf32>
    %cst_74 = arith.constant 0.693147182 : f32
    %183 = vector.broadcast %cst_74 : f32 to vector<8x32xf32>
    %184 = arith.subf %182, %183 : vector<8x32xf32>
    %185 = vector.extract_strided_slice %167 {offsets = [40, 0], sizes = [32, 32], strides = [1, 1]} : vector<73x32xf32> to vector<32x32xf32>
    %cst_75 = arith.constant dense<0.000000e+00> : vector<8x32xf32>
    %186 = tpu.matmul %184, %185, %cst_75 {dimension_numbers = #tpu.dot_dimension_numbers<[1], [0], [0], [1], [0, 0, 1, 1], [], []>} : vector<8x32xf32>, vector<32x32xf32>, vector<8x32xf32> -> vector<8x32xf32>
    %187 = vector.extract_strided_slice %167 {offsets = [72, 0], sizes = [1, 32], strides = [1, 1]} : vector<73x32xf32> to vector<1x32xf32>
    %188 = vector.broadcast %187 : vector<1x32xf32> to vector<8x32xf32>
    %189 = arith.addf %186, %188 : vector<8x32xf32>
    %190 = arith.addf %108, %189 : vector<8x32xf32>
    %c0_76 = arith.constant 0 : index
    %c0_77 = arith.constant 0 : index
    %191 = vector.load %arg12[%c0_76, %c0_77] : memref<8x3xf32, #tpu.memory_space<vmem>>, vector<8x3xf32>
    tpu.vector_store %arg12[%c0_76, %c0_77], %140 {strides = array<i32>} : memref<8x3xf32, #tpu.memory_space<vmem>>, vector<8x3xf32>,
    %c0_78 = arith.constant 0 : index
    %c0_79 = arith.constant 0 : index
    %192 = vector.load %arg13[%c0_78, %c0_79] : memref<8x32xf32, #tpu.memory_space<vmem>>, vector<8x32xf32>
    tpu.vector_store %arg13[%c0_78, %c0_79], %190 {strides = array<i32>} : memref<8x32xf32, #tpu.memory_space<vmem>>, vector<8x32xf32>,
    return
  }
}

</mosaic_0001>

<llo_original>
// kernel: tpu_custom_call.1
$region0: #{tpu_custom_call.1}
  #allocation0 [shape = 'u32[]', space=smem, size = 0x4, offset = 0x4, fixed_abs, tag = 'smem constant byte address 0x4 - core index']
  #allocation1 [shape = 'u32[144,128]{1,0:T(1,128)}', space=vmem, size = 0x12000, scoped, tag = 'internal scratch']
  %s0 = inlined_call_operand.vmem [shape: f32[8,3], index: 0, kind: input, shape index: {}, may-alias: {0,12}]
  %s1 = inlined_call_operand.vmem [shape: f32[8,32], index: 1, kind: input, shape index: {}, may-alias: {1,13}]
  %s2 = inlined_call_operand.vmem [shape: bf16[32,8], index: 2, kind: input, shape index: {}]
  %s3 = inlined_call_operand.vmem [shape: bf16[8,16], index: 3, kind: input, shape index: {}]
  %s4 = inlined_call_operand.vmem [shape: bf16[8,16], index: 4, kind: input, shape index: {}]
  %s5 = inlined_call_operand.vmem [shape: f32[8,1], index: 5, kind: input, shape index: {}]
  %s6 = inlined_call_operand.vmem [shape: f32[1,16], index: 6, kind: input, shape index: {}]
  %s7 = inlined_call_operand.vmem [shape: f32[3,40], index: 7, kind: input, shape index: {}]
  %s8 = inlined_call_operand.vmem [shape: f32[2,32,40], index: 8, kind: input, shape index: {}]
  %s9 = inlined_call_operand.vmem [shape: f32[2,17,33], index: 9, kind: input, shape index: {}]
  %s10 = inlined_call_operand.vmem [shape: f32[2,33,32], index: 10, kind: input, shape index: {}]
  %s11 = inlined_call_operand.vmem [shape: f32[2,73,32], index: 11, kind: input, shape index: {}]
  %s12 = inlined_call_operand.vmem [shape: f32[8,3], index: 12, kind: output, shape index: {0}, may-alias: {0,12}]
  %s13 = inlined_call_operand.vmem [shape: f32[8,32], index: 13, kind: output, shape index: {1}, may-alias: {1,13}]
  %14 = xla_tuple %s12, %s13
  %s15 = sld [smem:[#allocation0]]
  $region66: #{tpu_custom_call.1} parent=0
    _
  %s17 = ssub.s32 1, %s15
  %s18 = scalar_select 0, %s17, %s15
  // Predicated region
  $region2: #{tpu_custom_call.1} parent=0 // pred_check
    _
  $region3: #{tpu_custom_call.1} parent=0 // pred_check_branch
    %20 = sbr.rel (0) target = $region5
  $region4: #{tpu_custom_call.1} parent=0 // pred_region
    _
  $region5: #{tpu_custom_call.1} parent=0 // pred_fallthru
    _
  // Predicated region
  $region6: #{tpu_custom_call.1} parent=0 // pred_check
    _
  $region7: #{tpu_custom_call.1} parent=0 // pred_check_branch
    %22 = sbr.rel (0) target = $region9
  $region8: #{tpu_custom_call.1} parent=0 // pred_region
    _
  $region9: #{tpu_custom_call.1} parent=0 // pred_fallthru
    _
  // Predicated region
  $region10: #{tpu_custom_call.1} parent=0 // pred_check
    _
  $region11: #{tpu_custom_call.1} parent=0 // pred_check_branch
    %24 = sbr.rel (0) target = $region13
  $region12: #{tpu_custom_call.1} parent=0 // pred_region
    _
  $region13: #{tpu_custom_call.1} parent=0 // pred_fallthru
    _
  // Predicated region
  $region14: #{tpu_custom_call.1} parent=0 // pred_check
    _
  $region15: #{tpu_custom_call.1} parent=0 // pred_check_branch
    %26 = sbr.rel (0) target = $region17
  $region16: #{tpu_custom_call.1} parent=0 // pred_region
    _
  $region17: #{tpu_custom_call.1} parent=0 // pred_fallthru
    _
  // Predicated region
  $region18: #{tpu_custom_call.1} parent=0 // pred_check
    _
  $region19: #{tpu_custom_call.1} parent=0 // pred_check_branch
    %28 = sbr.rel (0) target = $region21
  $region20: #{tpu_custom_call.1} parent=0 // pred_region
    _
  $region21: #{tpu_custom_call.1} parent=0 // pred_fallthru
    _
  // Predicated region
  $region22: #{tpu_custom_call.1} parent=0 // pred_check
    _
  $region23: #{tpu_custom_call.1} parent=0 // pred_check_branch
    %30 = sbr.rel (0) target = $region25
  $region24: #{tpu_custom_call.1} parent=0 // pred_region
    _
  $region25: #{tpu_custom_call.1} parent=0 // pred_fallthru
    _
  // Predicated region
  $region26: #{tpu_custom_call.1} parent=0 // pred_check
    _
  $region27: #{tpu_custom_call.1} parent=0 // pred_check_branch
    %32 = sbr.rel (0) target = $region29
  $region28: #{tpu_custom_call.1} parent=0 // pred_region
    _
  $region29: #{tpu_custom_call.1} parent=0 // pred_fallthru
    _
  // Predicated region
  $region30: #{tpu_custom_call.1} parent=0 // pred_check
    _
  $region31: #{tpu_custom_call.1} parent=0 // pred_check_branch
    %34 = sbr.rel (0) target = $region33
  $region32: #{tpu_custom_call.1} parent=0 // pred_region
    _
  $region33: #{tpu_custom_call.1} parent=0 // pred_fallthru
    _
  // Predicated region
  $region34: #{tpu_custom_call.1} parent=0 // pred_check
    _
  $region35: #{tpu_custom_call.1} parent=0 // pred_check_branch
    %36 = sbr.rel (0) target = $region37
  $region36: #{tpu_custom_call.1} parent=0 // pred_region
    _
  $region37: #{tpu_custom_call.1} parent=0 // pred_fallthru
    _
  // Predicated region
  $region38: #{tpu_custom_call.1} parent=0 // pred_check
    _
  $region39: #{tpu_custom_call.1} parent=0 // pred_check_branch
    %38 = sbr.rel (0) target = $region41
  $region40: #{tpu_custom_call.1} parent=0 // pred_region
    _
  $region41: #{tpu_custom_call.1} parent=0 // pred_fallthru
    _
  // Predicated region
  $region42: #{tpu_custom_call.1} parent=0 // pred_check
    _
  $region43: #{tpu_custom_call.1} parent=0 // pred_check_branch
    %40 = sbr.rel (0) target = $region45
  $region44: #{tpu_custom_call.1} parent=0 // pred_region
    _
  $region45: #{tpu_custom_call.1} parent=0 // pred_fallthru
    _
  // Predicated region
  $region46: #{tpu_custom_call.1} parent=0 // pred_check
    _
  $region47: #{tpu_custom_call.1} parent=0 // pred_check_branch
    %42 = sbr.rel (0) target = $region49
  $region48: #{tpu_custom_call.1} parent=0 // pred_region
    _
  $region49: #{tpu_custom_call.1} parent=0 // pred_fallthru
    _
  %v44 = vld [vmem:[%s0] sm:$0xff]
  %v45 = vld [vmem:[%s1] sm:$0xff]
  %v46 = vld [vmem:[%s2] sm:$0xf]
  %v47 = vld [vmem:[%s2 + $0x4] sm:$0xf]
  %v48 = vld [vmem:[%s2 + $0x8] sm:$0xf]
  %v49 = vld [vmem:[%s2 + $0xc] sm:$0xf]
  %v50 = vld [vmem:[%s3] sm:$0xf]
  %v51 = vld [vmem:[%s4] sm:$0xf]
  %v52 = vld [vmem:[%s5] sm:$0xff]
  %v53 = vld [vmem:[%s7] sm:$0x7]
  %v54 = vld [vmem:[%s8] sm:$0xff]
  %v55 = vld [vmem:[%s8 + $0x8] sm:$0xff]
  %v56 = vld [vmem:[%s8 + $0x10] sm:$0xff]
  %v57 = vld [vmem:[%s8 + $0x18] sm:$0xff]
  %vm58 = vcmask 261120
  %v60 = vsel %vm58, %v45, 0
  %62 = vmatprep.subr.mxu0 0.0
  %63 = vmatpush1.msra.mxu0 %v54
  %64 = vmatprep.subr.mxu0 0.0
  %65 = vmatpush1.msra.mxu0 %v55
  %66 = vmatprep.subr.mxu0 0.0
  %67 = vmatpush1.msra.mxu0 %v56
  %68 = vmatprep.subr.mxu0 0.0
  %69 = vmatpush1.msra.mxu0 %v57
  %70 = vmatprep.subr.mxu0 0.0
  %71 = vmatpush1.msra.mxu0 0.0
  %72 = vmatprep.subr.mxu0 0.0
  %73 = vmatpush1.msra.mxu0 0.0
  %74 = vmatprep.subr.mxu0 0.0
  %75 = vmatpush1.msra.mxu0 0.0
  %76 = vmatprep.subr.mxu0 0.0
  %77 = vmatpush1.msra.mxu0 0.0
  %78 = vmatprep.subr.mxu0 0.0
  %79 = vmatpush1.msra.mxu0 0.0
  %80 = vmatprep.subr.mxu0 0.0
  %81 = vmatpush1.msra.mxu0 0.0
  %82 = vmatprep.subr.mxu0 0.0
  %83 = vmatpush1.msra.mxu0 0.0
  %84 = vmatprep.subr.mxu0 0.0
  %85 = vmatpush1.msra.mxu0 0.0
  %86 = vmatprep.subr.mxu0 0.0
  %87 = vmatpush1.msra.mxu0 0.0
  %88 = vmatprep.subr.mxu0 0.0
  %89 = vmatpush1.msra.mxu0 0.0
  %90 = vmatprep.subr.mxu0 0.0
  %91 = vmatpush1.msra.mxu0 0.0
  %92 = vmatprep.subr.mxu0 0.0
  %93 = vmatpush1.msra.mxu0 0.0
  %94 = vmatprep.subr.mxu0 0.0
  %95 = vmatpush1.msra.mxu0 0.0
  %96 = vmatprep.subr.mxu0 0.0
  %97 = vmatpush1.msra.mxu0 0.0
  %98 = vmatprep.subr.mxu0 0.0
  %99 = vmatpush1.msra.mxu0 0.0
  %100 = vmatprep.subr.mxu0 0.0
  %101 = vmatpush1.msra.mxu0 0.0
  %102 = vmatprep.subr.mxu0 0.0
  %103 = vmatpush1.msra.mxu0 0.0
  %104 = vmatprep.subr.mxu0 0.0
  %105 = vmatpush1.msra.mxu0 0.0
  %106 = vmatprep.subr.mxu0 0.0
  %107 = vmatpush1.msra.mxu0 0.0
  %108 = vmatprep.subr.mxu0 0.0
  %109 = vmatpush1.msra.mxu0 0.0
  %110 = vmatprep.subr.mxu0 0.0
  %111 = vmatpush1.msra.mxu0 0.0
  %112 = vmatprep.subr.mxu0 0.0
  %113 = vmatpush1.msra.mxu0 0.0
  %114 = vmatprep.subr.mxu0 0.0
  %115 = vmatpush1.msra.mxu0 0.0
  %116 = vmatprep.subr.mxu0 0.0
  %117 = vmatpush1.msra.mxu0 0.0
  %118 = vmatprep.subr.mxu0 0.0
  %119 = vmatpush1.msra.mxu0 0.0
  %120 = vmatprep.subr.mxu0 0.0
  %121 = vmatpush1.msra.mxu0 0.0
  %122 = vmatprep.subr.mxu0 0.0
  %123 = vmatpush1.msra.mxu0 0.0
  %124 = vmatprep.subr.mxu0 0.0
  %125 = vmatpush1.msra.mxu0 0.0
  %126 = vmatprep.mubr.f32.mxu0 0.0
  %127 = vmatmul.mubr.f32.gmra.mrb[0].mxu0 %v60
  %v128 = vpop.f32.mrb[0].mxu0
  %v129 = vadd.f32 0.0, %v128
  %v130 = vpop.f32.mrb[0].mxu0
  %131 = vdwg.mxu0
  %vm132 = vcmask 23552
  %v134 = vsel %vm132, %v44, 0
  %vm136 = vcmask 1042432
  %v138 = vsel %vm136, %v53, 0
  %140 = vmatprep.subr.mxu0 0.0
  %141 = vmatpush1.msra.mxu0 %v138
  %142 = vmatprep.subr.mxu0 0.0
  %143 = vmatpush1.msra.mxu0 0.0
  %144 = vmatprep.subr.mxu0 0.0
  %145 = vmatpush1.msra.mxu0 0.0
  %146 = vmatprep.subr.mxu0 0.0
  %147 = vmatpush1.msra.mxu0 0.0
  %148 = vmatprep.subr.mxu0 0.0
  %149 = vmatpush1.msra.mxu0 0.0
  %150 = vmatprep.subr.mxu0 0.0
  %151 = vmatpush1.msra.mxu0 0.0
  %152 = vmatprep.subr.mxu0 0.0
  %153 = vmatpush1.msra.mxu0 0.0
  %154 = vmatprep.subr.mxu0 0.0
  %155 = vmatpush1.msra.mxu0 0.0
  %156 = vmatprep.subr.mxu0 0.0
  %157 = vmatpush1.msra.mxu0 0.0
  %158 = vmatprep.subr.mxu0 0.0
  %159 = vmatpush1.msra.mxu0 0.0
  %160 = vmatprep.subr.mxu0 0.0
  %161 = vmatpush1.msra.mxu0 0.0
  %162 = vmatprep.subr.mxu0 0.0
  %163 = vmatpush1.msra.mxu0 0.0
  %164 = vmatprep.subr.mxu0 0.0
  %165 = vmatpush1.msra.mxu0 0.0
  %166 = vmatprep.subr.mxu0 0.0
  %167 = vmatpush1.msra.mxu0 0.0
  %168 = vmatprep.subr.mxu0 0.0
  %169 = vmatpush1.msra.mxu0 0.0
  %170 = vmatprep.subr.mxu0 0.0
  %171 = vmatpush1.msra.mxu0 0.0
  %172 = vmatprep.subr.mxu0 0.0
  %173 = vmatpush1.msra.mxu0 0.0
  %174 = vmatprep.subr.mxu0 0.0
  %175 = vmatpush1.msra.mxu0 0.0
  %176 = vmatprep.subr.mxu0 0.0
  %177 = vmatpush1.msra.mxu0 0.0
  %178 = vmatprep.subr.mxu0 0.0
  %179 = vmatpush1.msra.mxu0 0.0
  %180 = vmatprep.subr.mxu0 0.0
  %181 = vmatpush1.msra.mxu0 0.0
  %182 = vmatprep.subr.mxu0 0.0
  %183 = vmatpush1.msra.mxu0 0.0
  %184 = vmatprep.subr.mxu0 0.0
  %185 = vmatpush1.msra.mxu0 0.0
  %186 = vmatprep.subr.mxu0 0.0
  %187 = vmatpush1.msra.mxu0 0.0
  %188 = vmatprep.subr.mxu0 0.0
  %189 = vmatpush1.msra.mxu0 0.0
  %190 = vmatprep.subr.mxu0 0.0
  %191 = vmatpush1.msra.mxu0 0.0
  %192 = vmatprep.subr.mxu0 0.0
  %193 = vmatpush1.msra.mxu0 0.0
  %194 = vmatprep.subr.mxu0 0.0
  %195 = vmatpush1.msra.mxu0 0.0
  %196 = vmatprep.subr.mxu0 0.0
  %197 = vmatpush1.msra.mxu0 0.0
  %198 = vmatprep.subr.mxu0 0.0
  %199 = vmatpush1.msra.mxu0 0.0
  %200 = vmatprep.subr.mxu0 0.0
  %201 = vmatpush1.msra.mxu0 0.0
  %202 = vmatprep.subr.mxu0 0.0
  %203 = vmatpush1.msra.mxu0 0.0
  %204 = vmatprep.mubr.f32.mxu0 0.0
  %205 = vmatmul.mubr.f32.gmra.mrb[0].mxu0 %v134
  %v206 = vpop.f32.mrb[0].mxu0
  %v207 = vadd.f32 %v129, %v206
  %v208 = vpop.f32.mrb[0].mxu0
  %209 = vdwg.mxu0
  %v210 = vpack.c.bf16 %v207, %v207
  %v215 = vunpack.c.l.b16 %v46
  %v216 = vunpack.c.l.b16 %v47
  %v217 = vunpack.c.l.b16 %v48
  %v218 = vunpack.c.l.b16 %v49
  %v219 = vpack.c.b16 %v216, %v215
  %v220 = vpack.c.b16 %v218, %v217
  %vm221 = vcmask 64512
  %v223 = vsel %vm221, %v219, 0
  %v226 = vsel %vm221, %v220, 0
  %vm228 = vcmask 1043456
  %v230 = vsel %vm228, %v210, 0
  %232 = vmatprep.subr.bf16.mxu0 0
  %233 = vmatpush1.bf16.msra.mxu0 %v230
  %234 = vmatprep.subr.bf16.mxu0 0
  %235 = vmatpush1.bf16.msra.mxu0 0
  %236 = vmatprep.subr.bf16.mxu0 0
  %237 = vmatpush1.bf16.msra.mxu0 0
  %238 = vmatprep.subr.bf16.mxu0 0
  %239 = vmatpush1.bf16.msra.mxu0 0
  %240 = vmatprep.subr.bf16.mxu0 0
  %241 = vmatpush1.bf16.msra.mxu0 0
  %242 = vmatprep.subr.bf16.mxu0 0
  %243 = vmatpush1.bf16.msra.mxu0 0
  %244 = vmatprep.subr.bf16.mxu0 0
  %245 = vmatpush1.bf16.msra.mxu0 0
  %246 = vmatprep.subr.bf16.mxu0 0
  %247 = vmatpush1.bf16.msra.mxu0 0
  %248 = vmatprep.subr.bf16.mxu0 0
  %249 = vmatpush1.bf16.msra.mxu0 0
  %250 = vmatprep.subr.bf16.mxu0 0
  %251 = vmatpush1.bf16.msra.mxu0 0
  %252 = vmatprep.subr.bf16.mxu0 0
  %253 = vmatpush1.bf16.msra.mxu0 0
  %254 = vmatprep.subr.bf16.mxu0 0
  %255 = vmatpush1.bf16.msra.mxu0 0
  %256 = vmatprep.subr.bf16.mxu0 0
  %257 = vmatpush1.bf16.msra.mxu0 0
  %258 = vmatprep.subr.bf16.mxu0 0
  %259 = vmatpush1.bf16.msra.mxu0 0
  %260 = vmatprep.subr.bf16.mxu0 0
  %261 = vmatpush1.bf16.msra.mxu0 0
  %262 = vmatprep.subr.bf16.mxu0 0
  %263 = vmatpush1.bf16.msra.mxu0 0
  %264 = vmatprep.mubr.bf16.mxu0 0
  %265 = vmatmul.mubr.bf16.gmra.mrb[0].mxu0 %v223
  %v266 = vpop.f32.mrb[0].mxu0
  %v267 = vadd.f32 0.0, %v266
  %v268 = vpop.f32.mrb[0].mxu0
  %v269 = vpop.f32.mrb[0].mxu0
  %v270 = vadd.f32 0.0, %v269
  %v271 = vpop.f32.mrb[0].mxu0
  %272 = vmatprep.mubr.bf16.mxu0 0
  %273 = vmatmul.mubr.bf16.gmra.mrb[0].mxu0 %v226
  %v274 = vpop.f32.mrb[0].mxu0
  %v275 = vadd.f32 0.0, %v274
  %v276 = vpop.f32.mrb[0].mxu0
  %v277 = vpop.f32.mrb[0].mxu0
  %v278 = vadd.f32 0.0, %v277
  %v279 = vpop.f32.mrb[0].mxu0
  %280 = vdwg.mxu0
  %v281 = vsub.f32 %v267, %v275
  %v282 = vsub.f32 %v270, %v278
  %v283 = vmul.f32 %v281, %v281
  %v284 = vmul.f32 %v282, %v282
  %287 = vrot.lane.b32.xlu0 %v283, 96
  %v288 = vpop.permute.xlu0 %287
  %289 = vrot.lane.b32.xlu0 %v284, 96
  %v290 = vpop.permute.xlu0 %289
  %v293 = vsel %vm132, %v288, 0.0
  %294 = vadd.xlane.f32.xlu0 %v293
  %v295 = vpop.xlane.xlu0 %294
  %v296 = vsel %vm132, %v290, 0.0
  %297 = vadd.xlane.f32.xlu0 %v296
  %v298 = vpop.xlane.xlu0 %297
  %v299 = vrsqrt.pop %v295
  %v300 = vmul.f32 %v295, %v299
  %vm301 = vcmp.eq.f32.partialorder %v295, inf
  %v302 = vsel %vm301, %v295, %v300
  %vm303 = vcmp.eq.f32.partialorder %v295, 0.0
  %v304 = vand.u32 %v295, 2147483648
  %v305 = vsel %vm303, %v304, %v302
  %v306 = vrsqrt.pop %v298
  %v307 = vmul.f32 %v298, %v306
  %vm308 = vcmp.eq.f32.partialorder %v298, inf
  %v309 = vsel %vm308, %v298, %v307
  %vm310 = vcmp.eq.f32.partialorder %v298, 0.0
  %v311 = vand.u32 %v298, 2147483648
  %v312 = vsel %vm310, %v311, %v309
  %v313 = vld [vmem:[%s6] sm:$0x1]
  %v315 = vlaneseq
  %v316 = vshrl.u32 %v315, 7
  %v317 = vsub.s32 0, %v316
  %v318 = vrot.slane %v313, %v317
  %v320 = vsub.f32 %v305, %v318
  %v321 = vsub.f32 %v312, %v318
  %v322 = vmul.f32 %v320, -1.125
  %v323 = vmul.f32 %v321, -1.125
  %v324 = vmul.f32 %v322, %v320
  %v325 = vmul.f32 %v323, %v321
  %v326 = vmul.f32 %v324, 1.442695
  %v327 = vpow.pop %v326
  %v328 = vmul.f32 %v325, 1.442695
  %v329 = vpow.pop %v328
  %v330 = vmul.f32 %v305, 0.31415927
  %v331 = vmul.f32 %v312, 0.31415927
  %v332 = vand.u32 2147483647, %v330
  %vm333 = vcmp.le.f32.partialorder %v332, 0.7853982
  %vm334 = vcmp.lt.s32.totalorder %v330, 0
  %v335 = vand.u32 %v330, 2139095040
  %v336 = vshrl.u32 %v335, 23
  %v337 = vsub.s32 %v336, 127
  %v338 = vand.u32 2147483647, %v330
  %v339 = vand.u32 %v338, 8388607
  %v340 = vor.u32 %v339, 8388608
  %v341 = vsub.s32 0, %v340
  %v342 = vadd.s32 %v337, 1
  %vm343 = vcmp.gt.s32.totalorder %v342, 0
  %v344 = vsel %vm343, %v342, 0
  %v345 = vshrl.u32 %v344, 5
  %v346 = vand.u32 %v344, 31
  %v347 = vsub.s32 32, %v346
  %v348 = vshrl.u32 683565275, %v347
  %v349 = vshll.u32 683565275, %v346
  %v350 = vshrl.u32 2475754826, %v347
  %v351 = vor.u32 %v349, %v350
  %v352 = vshll.u32 2475754826, %v346
  %v353 = vshrl.u32 2131351028, %v347
  %v354 = vor.u32 %v352, %v353
  %v355 = vshll.u32 2131351028, %v346
  %v356 = vshrl.u32 2102212464, %v347
  %v357 = vor.u32 %v355, %v356
  %v358 = vshll.u32 2102212464, %v346
  %v359 = vshrl.u32 920167782, %v347
  %v360 = vor.u32 %v358, %v359
  %v361 = vshll.u32 920167782, %v346
  %v362 = vshrl.u32 1326507024, %v347
  %v363 = vor.u32 %v361, %v362
  %vm364 = vcmp.lt.s32.totalorder %v345, 1
  %vm365 = vcmp.lt.s32.totalorder %v345, 2
  %vm366 = vcmp.lt.s32.totalorder %v345, 3
  %vm367 = vcmp.lt.s32.totalorder %v345, 4
  %v368 = vsel %vm364, %v348, %v351
  %v369 = vsel %vm367, %v357, 2102212464
  %v370 = vsel %vm366, %v354, %v369
  %v371 = vsel %vm365, %v368, %v370
  %v372 = vsel %vm364, %v351, %v354
  %v373 = vsel %vm367, %v360, 920167782
  %v374 = vsel %vm366, %v357, %v373
  %v375 = vsel %vm365, %v372, %v374
  %v376 = vsel %vm364, %v354, %v357
  %v377 = vsel %vm367, %v363, 1326507024
  %v378 = vsel %vm366, %v360, %v377
  %v379 = vsel %vm365, %v376, %v378
  %v380 = vshll.u32 %v340, 8
  %v381 = vmul.u32.u64.compose %v380, %v379
  %v382 = vextract.low.u32 %v381
  %v383 = vextract.high.u32 %v381
  %v384 = vmul.u32.u64.compose %v380, %v375
  %v385 = vextract.low.u32 %v384
  %v386 = vextract.high.u32 %v384
  %v387 = vmul.u32 %v380, %v371
  %v388 = vadd.s32 %v383, %v385
  %vm389 = vc.u32 %v383, %v385
  %v390 = vadd.s32 %v386, 1
  %v391 = vsel %vm389, %v390, %v386
  %v392 = vadd.s32 %v387, %v391
  %v393 = vadd.s32 %v392, 536870912
  %v394 = vshrl.u32 %v393, 30
  %v395 = vshll.u32 %v394, 30
  %v396 = vsub.s32 %v392, %v395
  %vm397 = vcmp.lt.s32.totalorder %v396, 0
  %v398 = vsub.s32 0, %v396
  %v399 = vsel %vm397, %v398, %v396
  %v400 = vclz %v399
  %v401 = vsub.s32 %v400, 2
  %vm402 = vcmp.gt.s32.totalorder 0, %v401
  %v403 = vsel %vm402, 0, %v401
  %v404 = vsub.s32 32, %v403
  %v405 = vshll.u32 %v396, %v403
  %v406 = vshrl.u32 %v388, %v404
  %v407 = vor.u32 %v405, %v406
  %v408 = vsub.s32 4294967266, %v403
  %v409 = vadd.s32 %v408, 127
  %v410 = vshll.u32 %v409, 23
  %v411 = vor.u32 4788187, %v410
  %v412 = vand.u32 2147483647, %v411
  %v414 = vcvt.s32.f32 %v407
  %v415 = vmul.f32 %v414, %v412
  %v416 = vxor.u32 %v415, 2147483648
  %v417 = vsel %vm334, %v416, %v415
  %v418 = vsub.s32 4, %v394
  %v419 = vsel %vm334, %v418, %v394
  %v420 = vsel %vm333, %v330, %v417
  %v421 = vsel %vm333, 0, %v419
  %v422 = vcosq.f32.pop %v420
  %v423 = vsinq.f32.pop %v420
  %vm424 = vweird.f32 %v330
  %v425 = vand.u32 %v421, 3
  %vm426 = vcmp.lt.s32.totalorder %v425, 2
  %vm427 = vcmp.eq.s32.totalorder %v425, 0
  %v428 = vxor.u32 %v423, 2147483648
  %v429 = vsel %vm427, %v422, %v428
  %vm430 = vcmp.eq.s32.totalorder %v425, 2
  %v431 = vxor.u32 %v422, 2147483648
  %v432 = vsel %vm430, %v431, %v423
  %v433 = vsel %vm426, %v429, %v432
  %v434 = vsel %vm424, nan, %v433
  %v435 = vand.u32 2147483647, %v331
  %vm436 = vcmp.le.f32.partialorder %v435, 0.7853982
  %vm437 = vcmp.lt.s32.totalorder %v331, 0
  %v438 = vand.u32 %v331, 2139095040
  %v439 = vshrl.u32 %v438, 23
  %v440 = vsub.s32 %v439, 127
  %v441 = vand.u32 2147483647, %v331
  %v442 = vand.u32 %v441, 8388607
  %v443 = vor.u32 %v442, 8388608
  %v444 = vsub.s32 0, %v443
  %v445 = vadd.s32 %v440, 1
  %vm446 = vcmp.gt.s32.totalorder %v445, 0
  %v447 = vsel %vm446, %v445, 0
  %v448 = vshrl.u32 %v447, 5
  %v449 = vand.u32 %v447, 31
  %v450 = vsub.s32 32, %v449
  %v451 = vshrl.u32 683565275, %v450
  %v452 = vshll.u32 683565275, %v449
  %v453 = vshrl.u32 2475754826, %v450
  %v454 = vor.u32 %v452, %v453
  %v455 = vshll.u32 2475754826, %v449
  %v456 = vshrl.u32 2131351028, %v450
  %v457 = vor.u32 %v455, %v456
  %v458 = vshll.u32 2131351028, %v449
  %v459 = vshrl.u32 2102212464, %v450
  %v460 = vor.u32 %v458, %v459
  %v461 = vshll.u32 2102212464, %v449
  %v462 = vshrl.u32 920167782, %v450
  %v463 = vor.u32 %v461, %v462
  %v464 = vshll.u32 920167782, %v449
  %v465 = vshrl.u32 1326507024, %v450
  %v466 = vor.u32 %v464, %v465
  %vm467 = vcmp.lt.s32.totalorder %v448, 1
  %vm468 = vcmp.lt.s32.totalorder %v448, 2
  %vm469 = vcmp.lt.s32.totalorder %v448, 3
  %vm470 = vcmp.lt.s32.totalorder %v448, 4
  %v471 = vsel %vm467, %v451, %v454
  %v472 = vsel %vm470, %v460, 2102212464
  %v473 = vsel %vm469, %v457, %v472
  %v474 = vsel %vm468, %v471, %v473
  %v475 = vsel %vm467, %v454, %v457
  %v476 = vsel %vm470, %v463, 920167782
  %v477 = vsel %vm469, %v460, %v476
  %v478 = vsel %vm468, %v475, %v477
  %v479 = vsel %vm467, %v457, %v460
  %v480 = vsel %vm470, %v466, 1326507024
  %v481 = vsel %vm469, %v463, %v480
  %v482 = vsel %vm468, %v479, %v481
  %v483 = vshll.u32 %v443, 8
  %v484 = vmul.u32.u64.compose %v483, %v482
  %v485 = vextract.low.u32 %v484
  %v486 = vextract.high.u32 %v484
  %v487 = vmul.u32.u64.compose %v483, %v478
  %v488 = vextract.low.u32 %v487
  %v489 = vextract.high.u32 %v487
  %v490 = vmul.u32 %v483, %v474
  %v491 = vadd.s32 %v486, %v488
  %vm492 = vc.u32 %v486, %v488
  %v493 = vadd.s32 %v489, 1
  %v494 = vsel %vm492, %v493, %v489
  %v495 = vadd.s32 %v490, %v494
  %v496 = vadd.s32 %v495, 536870912
  %v497 = vshrl.u32 %v496, 30
  %v498 = vshll.u32 %v497, 30
  %v499 = vsub.s32 %v495, %v498
  %vm500 = vcmp.lt.s32.totalorder %v499, 0
  %v501 = vsub.s32 0, %v499
  %v502 = vsel %vm500, %v501, %v499
  %v503 = vclz %v502
  %v504 = vsub.s32 %v503, 2
  %vm505 = vcmp.gt.s32.totalorder 0, %v504
  %v506 = vsel %vm505, 0, %v504
  %v507 = vsub.s32 32, %v506
  %v508 = vshll.u32 %v499, %v506
  %v509 = vshrl.u32 %v491, %v507
  %v510 = vor.u32 %v508, %v509
  %v511 = vsub.s32 4294967266, %v506
  %v512 = vadd.s32 %v511, 127
  %v513 = vshll.u32 %v512, 23
  %v514 = vor.u32 4788187, %v513
  %v515 = vand.u32 2147483647, %v514
  %v517 = vcvt.s32.f32 %v510
  %v518 = vmul.f32 %v517, %v515
  %v519 = vxor.u32 %v518, 2147483648
  %v520 = vsel %vm437, %v519, %v518
  %v521 = vsub.s32 4, %v497
  %v522 = vsel %vm437, %v521, %v497
  %v523 = vsel %vm436, %v331, %v520
  %v524 = vsel %vm436, 0, %v522
  %v525 = vcosq.f32.pop %v523
  %v526 = vsinq.f32.pop %v523
  %vm527 = vweird.f32 %v331
  %v528 = vand.u32 %v524, 3
  %vm529 = vcmp.lt.s32.totalorder %v528, 2
  %vm530 = vcmp.eq.s32.totalorder %v528, 0
  %v531 = vxor.u32 %v526, 2147483648
  %v532 = vsel %vm530, %v525, %v531
  %vm533 = vcmp.eq.s32.totalorder %v528, 2
  %v534 = vxor.u32 %v525, 2147483648
  %v535 = vsel %vm533, %v534, %v526
  %v536 = vsel %vm529, %v532, %v535
  %v537 = vsel %vm527, nan, %v536
  %v538 = vadd.f32 %v434, 1.0
  %v539 = vadd.f32 %v537, 1.0
  %v540 = vmul.f32 %v538, 0.5
  %v541 = vmul.f32 %v539, 0.5
  %v542 = vld [vmem:[%s9] sm:$0xff]
  %v543 = vld [vmem:[%s9 + $0x8] sm:$0xff]
  %v544 = vld [vmem:[%s9 + $0x10] sm:$0x1]
  %v545 = vlaneseq
  %v546 = vshrl.u32 %v545, 7
  %v547 = vsub.s32 0, %v546
  %v548 = vrot.slane %v544, %v547
  %vm549 = vcmask 130048
  %v551 = vsel %vm549, %v327, 0
  %v554 = vsel %vm549, %v329, 0
  %556 = vmatprep.subr.mxu0 0.0
  %557 = vmatpush1.msra.mxu0 %v542
  %558 = vmatprep.subr.mxu0 0.0
  %559 = vmatpush1.msra.mxu0 %v543
  %560 = vmatprep.subr.mxu0 0.0
  %561 = vmatpush1.msra.mxu0 0.0
  %562 = vmatprep.subr.mxu0 0.0
  %563 = vmatpush1.msra.mxu0 0.0
  %564 = vmatprep.subr.mxu0 0.0
  %565 = vmatpush1.msra.mxu0 0.0
  %566 = vmatprep.subr.mxu0 0.0
  %567 = vmatpush1.msra.mxu0 0.0
  %568 = vmatprep.subr.mxu0 0.0
  %569 = vmatpush1.msra.mxu0 0.0
  %570 = vmatprep.subr.mxu0 0.0
  %571 = vmatpush1.msra.mxu0 0.0
  %572 = vmatprep.subr.mxu0 0.0
  %573 = vmatpush1.msra.mxu0 0.0
  %574 = vmatprep.subr.mxu0 0.0
  %575 = vmatpush1.msra.mxu0 0.0
  %576 = vmatprep.subr.mxu0 0.0
  %577 = vmatpush1.msra.mxu0 0.0
  %578 = vmatprep.subr.mxu0 0.0
  %579 = vmatpush1.msra.mxu0 0.0
  %580 = vmatprep.subr.mxu0 0.0
  %581 = vmatpush1.msra.mxu0 0.0
  %582 = vmatprep.subr.mxu0 0.0
  %583 = vmatpush1.msra.mxu0 0.0
  %584 = vmatprep.subr.mxu0 0.0
  %585 = vmatpush1.msra.mxu0 0.0
  %586 = vmatprep.subr.mxu0 0.0
  %587 = vmatpush1.msra.mxu0 0.0
  %588 = vmatprep.subr.mxu0 0.0
  %589 = vmatpush1.msra.mxu0 0.0
  %590 = vmatprep.subr.mxu0 0.0
  %591 = vmatpush1.msra.mxu0 0.0
  %592 = vmatprep.subr.mxu0 0.0
  %593 = vmatpush1.msra.mxu0 0.0
  %594 = vmatprep.subr.mxu0 0.0
  %595 = vmatpush1.msra.mxu0 0.0
  %596 = vmatprep.subr.mxu0 0.0
  %597 = vmatpush1.msra.mxu0 0.0
  %598 = vmatprep.subr.mxu0 0.0
  %599 = vmatpush1.msra.mxu0 0.0
  %600 = vmatprep.subr.mxu0 0.0
  %601 = vmatpush1.msra.mxu0 0.0
  %602 = vmatprep.subr.mxu0 0.0
  %603 = vmatpush1.msra.mxu0 0.0
  %604 = vmatprep.subr.mxu0 0.0
  %605 = vmatpush1.msra.mxu0 0.0
  %606 = vmatprep.subr.mxu0 0.0
  %607 = vmatpush1.msra.mxu0 0.0
  %608 = vmatprep.subr.mxu0 0.0
  %609 = vmatpush1.msra.mxu0 0.0
  %610 = vmatprep.subr.mxu0 0.0
  %611 = vmatpush1.msra.mxu0 0.0
  %612 = vmatprep.subr.mxu0 0.0
  %613 = vmatpush1.msra.mxu0 0.0
  %614 = vmatprep.subr.mxu0 0.0
  %615 = vmatpush1.msra.mxu0 0.0
  %616 = vmatprep.subr.mxu0 0.0
  %617 = vmatpush1.msra.mxu0 0.0
  %618 = vmatprep.subr.mxu0 0.0
  %619 = vmatpush1.msra.mxu0 0.0
  %620 = vmatprep.mubr.f32.mxu0 0.0
  %621 = vmatmul.mubr.f32.gmra.mrb[0].mxu0 %v551
  %v622 = vpop.f32.mrb[0].mxu0
  %v623 = vadd.f32 %v548, %v622
  %v624 = vpop.f32.mrb[0].mxu0
  %625 = vmatprep.mubr.f32.mxu0 0.0
  %626 = vmatmul.mubr.f32.gmra.mrb[0].mxu0 %v554
  %v627 = vpop.f32.mrb[0].mxu0
  %v628 = vadd.f32 %v548, %v627
  %v629 = vpop.f32.mrb[0].mxu0
  %630 = vdwg.mxu0
  %633 = vrot.lane.b32.xlu0 %v267, 125
  %v634 = vpop.permute.xlu0 %633
  %635 = vrot.lane.b32.xlu0 %v270, 125
  %v636 = vpop.permute.xlu0 %635
  %v639 = vadd.f32 %v623, %v634
  %v640 = vadd.f32 %v628, %v636
  %643 = vrot.lane.b32.xlu0 %v275, 124
  %v644 = vpop.permute.xlu0 %643
  %645 = vrot.lane.b32.xlu0 %v278, 124
  %v646 = vpop.permute.xlu0 %645
  %v649 = vadd.f32 %v639, %v644
  %v650 = vadd.f32 %v640, %v646
  %652 = vset.pattern.permute.xlu0 32
  %653 = vperm.xlu0 %652, %v649
  %v654 = vpop.permute.xlu0 %653
  %657 = vset.pattern.permute.xlu0 32
  %658 = vperm.xlu0 %657, %v650
  %v659 = vpop.permute.xlu0 %658
  %v661 = vmul.f32 %v281, %v654
  %v662 = vmul.f32 %v282, %v659
  %v663 = vpack.c.bf16 %v662, %v661
  %665 = vrot.lane.b32.xlu0 %v663, 96
  %v666 = vpop.permute.xlu0 %665
  %v669 = vsel %vm549, %v50, 0
  %671 = vmatprep.subr.bf16.mxu0 0
  %672 = vmatpush1.bf16.msra.mxu0 %v666
  %673 = vmatprep.subr.bf16.mxu0 0
  %674 = vmatpush1.bf16.msra.mxu0 0
  %675 = vmatprep.subr.bf16.mxu0 0
  %676 = vmatpush1.bf16.msra.mxu0 0
  %677 = vmatprep.subr.bf16.mxu0 0
  %678 = vmatpush1.bf16.msra.mxu0 0
  %679 = vmatprep.subr.bf16.mxu0 0
  %680 = vmatpush1.bf16.msra.mxu0 0
  %681 = vmatprep.subr.bf16.mxu0 0
  %682 = vmatpush1.bf16.msra.mxu0 0
  %683 = vmatprep.subr.bf16.mxu0 0
  %684 = vmatpush1.bf16.msra.mxu0 0
  %685 = vmatprep.subr.bf16.mxu0 0
  %686 = vmatpush1.bf16.msra.mxu0 0
  %687 = vmatprep.subr.bf16.mxu0 0
  %688 = vmatpush1.bf16.msra.mxu0 0
  %689 = vmatprep.subr.bf16.mxu0 0
  %690 = vmatpush1.bf16.msra.mxu0 0
  %691 = vmatprep.subr.bf16.mxu0 0
  %692 = vmatpush1.bf16.msra.mxu0 0
  %693 = vmatprep.subr.bf16.mxu0 0
  %694 = vmatpush1.bf16.msra.mxu0 0
  %695 = vmatprep.subr.bf16.mxu0 0
  %696 = vmatpush1.bf16.msra.mxu0 0
  %697 = vmatprep.subr.bf16.mxu0 0
  %698 = vmatpush1.bf16.msra.mxu0 0
  %699 = vmatprep.subr.bf16.mxu0 0
  %700 = vmatpush1.bf16.msra.mxu0 0
  %701 = vmatprep.subr.bf16.mxu0 0
  %702 = vmatpush1.bf16.msra.mxu0 0
  %703 = vmatprep.mubr.bf16.mxu0 0
  %704 = vmatmul.mubr.bf16.gmra.mrb[0].mxu0 %v669
  %v705 = vpop.f32.mrb[0].mxu0
  %v706 = vadd.f32 0.0, %v705
  %v707 = vpop.f32.mrb[0].mxu0
  %v708 = vpop.f32.mrb[0].mxu0
  %v709 = vpop.f32.mrb[0].mxu0
  %710 = vdwg.mxu0
  %712 = vset.pattern.permute.xlu0 0
  %713 = vperm.xlu0 %712, %v52
  %v714 = vpop.permute.xlu0 %713
  %v716 = vmul.f32 %v706, %v714
  %v717 = vadd.f32 %v44, %v716
  %v718 = vld [vmem:[%s10] sm:$0xff]
  %v719 = vld [vmem:[%s10 + $0x8] sm:$0xff]
  %v720 = vld [vmem:[%s10 + $0x10] sm:$0xff]
  %v721 = vld [vmem:[%s10 + $0x18] sm:$0xff]
  %v722 = vld [vmem:[%s10 + $0x20] sm:$0x1]
  %v723 = vmax.f32 %v623, 0.0
  %v724 = vmax.f32 %v628, 0.0
  %v725 = vand.u32 2147483647, %v623
  %v726 = vand.u32 2147483647, %v628
  %v727 = vsub.f32 0.0, %v725
  %v728 = vsub.f32 0.0, %v726
  %v729 = vmul.f32 %v727, 1.442695
  %v730 = vpow.pop %v729
  %v731 = vmul.f32 %v728, 1.442695
  %v732 = vpow.pop %v731
  %v733 = vadd.f32 %v730, 1.0
  %v734 = vadd.f32 %v732, 1.0
  %v735 = vlog2.pop %v733
  %v736 = vmul.f32 %v735, 0.6931472
  %v737 = vlog2.pop %v734
  %v738 = vmul.f32 %v737, 0.6931472
  %v739 = vadd.f32 %v723, %v736
  %v740 = vadd.f32 %v724, %v738
  %v741 = vsub.f32 %v739, 0.6931472
  %v742 = vsub.f32 %v740, 0.6931472
  %v743 = vlaneseq
  %v744 = vshrl.u32 %v743, 7
  %v745 = vsub.s32 0, %v744
  %v746 = vrot.slane %v722, %v745
  %v748 = vsel %vm58, %v741, 0
  %v751 = vsel %vm58, %v742, 0
  %753 = vmatprep.subr.mxu0 0.0
  %754 = vmatpush1.msra.mxu0 %v718
  %755 = vmatprep.subr.mxu0 0.0
  %756 = vmatpush1.msra.mxu0 %v719
  %757 = vmatprep.subr.mxu0 0.0
  %758 = vmatpush1.msra.mxu0 %v720
  %759 = vmatprep.subr.mxu0 0.0
  %760 = vmatpush1.msra.mxu0 %v721
  %761 = vmatprep.subr.mxu0 0.0
  %762 = vmatpush1.msra.mxu0 0.0
  %763 = vmatprep.subr.mxu0 0.0
  %764 = vmatpush1.msra.mxu0 0.0
  %765 = vmatprep.subr.mxu0 0.0
  %766 = vmatpush1.msra.mxu0 0.0
  %767 = vmatprep.subr.mxu0 0.0
  %768 = vmatpush1.msra.mxu0 0.0
  %769 = vmatprep.subr.mxu0 0.0
  %770 = vmatpush1.msra.mxu0 0.0
  %771 = vmatprep.subr.mxu0 0.0
  %772 = vmatpush1.msra.mxu0 0.0
  %773 = vmatprep.subr.mxu0 0.0
  %774 = vmatpush1.msra.mxu0 0.0
  %775 = vmatprep.subr.mxu0 0.0
  %776 = vmatpush1.msra.mxu0 0.0
  %777 = vmatprep.subr.mxu0 0.0
  %778 = vmatpush1.msra.mxu0 0.0
  %779 = vmatprep.subr.mxu0 0.0
  %780 = vmatpush1.msra.mxu0 0.0
  %781 = vmatprep.subr.mxu0 0.0
  %782 = vmatpush1.msra.mxu0 0.0
  %783 = vmatprep.subr.mxu0 0.0
  %784 = vmatpush1.msra.mxu0 0.0
  %785 = vmatprep.subr.mxu0 0.0
  %786 = vmatpush1.msra.mxu0 0.0
  %787 = vmatprep.subr.mxu0 0.0
  %788 = vmatpush1.msra.mxu0 0.0
  %789 = vmatprep.subr.mxu0 0.0
  %790 = vmatpush1.msra.mxu0 0.0
  %791 = vmatprep.subr.mxu0 0.0
  %792 = vmatpush1.msra.mxu0 0.0
  %793 = vmatprep.subr.mxu0 0.0
  %794 = vmatpush1.msra.mxu0 0.0
  %795 = vmatprep.subr.mxu0 0.0
  %796 = vmatpush1.msra.mxu0 0.0
  %797 = vmatprep.subr.mxu0 0.0
  %798 = vmatpush1.msra.mxu0 0.0
  %799 = vmatprep.subr.mxu0 0.0
  %800 = vmatpush1.msra.mxu0 0.0
  %801 = vmatprep.subr.mxu0 0.0
  %802 = vmatpush1.msra.mxu0 0.0
  %803 = vmatprep.subr.mxu0 0.0
  %804 = vmatpush1.msra.mxu0 0.0
  %805 = vmatprep.subr.mxu0 0.0
  %806 = vmatpush1.msra.mxu0 0.0
  %807 = vmatprep.subr.mxu0 0.0
  %808 = vmatpush1.msra.mxu0 0.0
  %809 = vmatprep.subr.mxu0 0.0
  %810 = vmatpush1.msra.mxu0 0.0
  %811 = vmatprep.subr.mxu0 0.0
  %812 = vmatpush1.msra.mxu0 0.0
  %813 = vmatprep.subr.mxu0 0.0
  %814 = vmatpush1.msra.mxu0 0.0
  %815 = vmatprep.subr.mxu0 0.0
  %816 = vmatpush1.msra.mxu0 0.0
  %817 = vmatprep.mubr.f32.mxu0 0.0
  %818 = vmatmul.mubr.f32.gmra.mrb[0].mxu0 %v748
  %v819 = vpop.f32.mrb[0].mxu0
  %v820 = vadd.f32 %v746, %v819
  %v821 = vpop.f32.mrb[0].mxu0
  %822 = vmatprep.mubr.f32.mxu0 0.0
  %823 = vmatmul.mubr.f32.gmra.mrb[0].mxu0 %v751
  %v824 = vpop.f32.mrb[0].mxu0
  %v825 = vadd.f32 %v746, %v824
  %v826 = vpop.f32.mrb[0].mxu0
  %827 = vdwg.mxu0
  %v828 = vmul.f32 %v820, %v540
  %v829 = vmul.f32 %v825, %v541
  %v830 = vmul.f32 %v267, %v828
  %v831 = vmul.f32 %v270, %v829
  %v832 = vpack.c.bf16 %v831, %v830
  %v834 = vsel %vm549, %v51, 0
  %836 = vmatprep.subr.bf16.mxu0 0
  %837 = vmatpush1.bf16.msra.mxu0 %v832
  %838 = vmatprep.subr.bf16.mxu0 0
  %839 = vmatpush1.bf16.msra.mxu0 0
  %840 = vmatprep.subr.bf16.mxu0 0
  %841 = vmatpush1.bf16.msra.mxu0 0
  %842 = vmatprep.subr.bf16.mxu0 0
  %843 = vmatpush1.bf16.msra.mxu0 0
  %844 = vmatprep.subr.bf16.mxu0 0
  %845 = vmatpush1.bf16.msra.mxu0 0
  %846 = vmatprep.subr.bf16.mxu0 0
  %847 = vmatpush1.bf16.msra.mxu0 0
  %848 = vmatprep.subr.bf16.mxu0 0
  %849 = vmatpush1.bf16.msra.mxu0 0
  %850 = vmatprep.subr.bf16.mxu0 0
  %851 = vmatpush1.bf16.msra.mxu0 0
  %852 = vmatprep.subr.bf16.mxu0 0
  %853 = vmatpush1.bf16.msra.mxu0 0
  %854 = vmatprep.subr.bf16.mxu0 0
  %855 = vmatpush1.bf16.msra.mxu0 0
  %856 = vmatprep.subr.bf16.mxu0 0
  %857 = vmatpush1.bf16.msra.mxu0 0
  %858 = vmatprep.subr.bf16.mxu0 0
  %859 = vmatpush1.bf16.msra.mxu0 0
  %860 = vmatprep.subr.bf16.mxu0 0
  %861 = vmatpush1.bf16.msra.mxu0 0
  %862 = vmatprep.subr.bf16.mxu0 0
  %863 = vmatpush1.bf16.msra.mxu0 0
  %864 = vmatprep.subr.bf16.mxu0 0
  %865 = vmatpush1.bf16.msra.mxu0 0
  %866 = vmatprep.subr.bf16.mxu0 0
  %867 = vmatpush1.bf16.msra.mxu0 0
  %868 = vmatprep.mubr.bf16.mxu0 0
  %869 = vmatmul.mubr.bf16.gmra.mrb[0].mxu0 %v834
  %v870 = vpop.f32.mrb[0].mxu0
  %v871 = vadd.f32 0.0, %v870
  %v872 = vpop.f32.mrb[0].mxu0
  %v873 = vpop.f32.mrb[0].mxu0
  %v874 = vpop.f32.mrb[0].mxu0
  %875 = vdwg.mxu0
  %v876 = vld [vmem:[%s11] sm:$0xff]
  %v877 = vld [vmem:[%s11 + $0x8] sm:$0xff]
  %v878 = vld [vmem:[%s11 + $0x10] sm:$0xff]
  %v879 = vld [vmem:[%s11 + $0x18] sm:$0xff]
  %v880 = vld [vmem:[%s11 + $0x20] sm:$0xff]
  %v881 = vld [vmem:[%s11 + $0x28] sm:$0xff]
  %v882 = vld [vmem:[%s11 + $0x30] sm:$0xff]
  %v883 = vld [vmem:[%s11 + $0x38] sm:$0xff]
  %v884 = vld [vmem:[%s11 + $0x40] sm:$0xff]
  %v885 = vld [vmem:[%s11 + $0x48] sm:$0x1]
  %v886 = vlaneseq
  %v887 = vshrl.u32 %v886, 7
  %v888 = vsub.s32 0, %v887
  %v889 = vrot.slane %v880, %v888
  %v891 = vsel %vm58, %v871, 0
  %893 = vmatprep.subr.mxu0 0.0
  %894 = vmatpush1.msra.mxu0 %v876
  %895 = vmatprep.subr.mxu0 0.0
  %896 = vmatpush1.msra.mxu0 %v877
  %897 = vmatprep.subr.mxu0 0.0
  %898 = vmatpush1.msra.mxu0 %v878
  %899 = vmatprep.subr.mxu0 0.0
  %900 = vmatpush1.msra.mxu0 %v879
  %901 = vmatprep.subr.mxu0 0.0
  %902 = vmatpush1.msra.mxu0 0.0
  %903 = vmatprep.subr.mxu0 0.0
  %904 = vmatpush1.msra.mxu0 0.0
  %905 = vmatprep.subr.mxu0 0.0
  %906 = vmatpush1.msra.mxu0 0.0
  %907 = vmatprep.subr.mxu0 0.0
  %908 = vmatpush1.msra.mxu0 0.0
  %909 = vmatprep.subr.mxu0 0.0
  %910 = vmatpush1.msra.mxu0 0.0
  %911 = vmatprep.subr.mxu0 0.0
  %912 = vmatpush1.msra.mxu0 0.0
  %913 = vmatprep.subr.mxu0 0.0
  %914 = vmatpush1.msra.mxu0 0.0
  %915 = vmatprep.subr.mxu0 0.0
  %916 = vmatpush1.msra.mxu0 0.0
  %917 = vmatprep.subr.mxu0 0.0
  %918 = vmatpush1.msra.mxu0 0.0
  %919 = vmatprep.subr.mxu0 0.0
  %920 = vmatpush1.msra.mxu0 0.0
  %921 = vmatprep.subr.mxu0 0.0
  %922 = vmatpush1.msra.mxu0 0.0
  %923 = vmatprep.subr.mxu0 0.0
  %924 = vmatpush1.msra.mxu0 0.0
  %925 = vmatprep.subr.mxu0 0.0
  %926 = vmatpush1.msra.mxu0 0.0
  %927 = vmatprep.subr.mxu0 0.0
  %928 = vmatpush1.msra.mxu0 0.0
  %929 = vmatprep.subr.mxu0 0.0
  %930 = vmatpush1.msra.mxu0 0.0
  %931 = vmatprep.subr.mxu0 0.0
  %932 = vmatpush1.msra.mxu0 0.0
  %933 = vmatprep.subr.mxu0 0.0
  %934 = vmatpush1.msra.mxu0 0.0
  %935 = vmatprep.subr.mxu0 0.0
  %936 = vmatpush1.msra.mxu0 0.0
  %937 = vmatprep.subr.mxu0 0.0
  %938 = vmatpush1.msra.mxu0 0.0
  %939 = vmatprep.subr.mxu0 0.0
  %940 = vmatpush1.msra.mxu0 0.0
  %941 = vmatprep.subr.mxu0 0.0
  %942 = vmatpush1.msra.mxu0 0.0
  %943 = vmatprep.subr.mxu0 0.0
  %944 = vmatpush1.msra.mxu0 0.0
  %945 = vmatprep.subr.mxu0 0.0
  %946 = vmatpush1.msra.mxu0 0.0
  %947 = vmatprep.subr.mxu0 0.0
  %948 = vmatpush1.msra.mxu0 0.0
  %949 = vmatprep.subr.mxu0 0.0
  %950 = vmatpush1.msra.mxu0 0.0
  %951 = vmatprep.subr.mxu0 0.0
  %952 = vmatpush1.msra.mxu0 0.0
  %953 = vmatprep.subr.mxu0 0.0
  %954 = vmatpush1.msra.mxu0 0.0
  %955 = vmatprep.subr.mxu0 0.0
  %956 = vmatpush1.msra.mxu0 0.0
  %957 = vmatprep.mubr.f32.mxu0 0.0
  %958 = vmatmul.mubr.f32.gmra.mrb[0].mxu0 %v891
  %v959 = vpop.f32.mrb[0].mxu0
  %v960 = vadd.f32 %v889, %v959
  %v961 = vpop.f32.mrb[0].mxu0
  %962 = vdwg.mxu0
  %v963 = vmax.f32 %v960, 0.0
  %v964 = vand.u32 2147483647, %v960
  %v965 = vsub.f32 0.0, %v964
  %v966 = vmul.f32 %v965, 1.442695
  %v967 = vpow.pop %v966
  %v968 = vadd.f32 %v967, 1.0
  %v969 = vlog2.pop %v968
  %v970 = vmul.f32 %v969, 0.6931472
  %v971 = vadd.f32 %v963, %v970
  %v972 = vsub.f32 %v971, 0.6931472
  %v973 = vlaneseq
  %v974 = vshrl.u32 %v973, 7
  %v975 = vsub.s32 0, %v974
  %v976 = vrot.slane %v885, %v975
  %v978 = vsel %vm58, %v972, 0
  %980 = vmatprep.subr.mxu0 0.0
  %981 = vmatpush1.msra.mxu0 %v881
  %982 = vmatprep.subr.mxu0 0.0
  %983 = vmatpush1.msra.mxu0 %v882
  %984 = vmatprep.subr.mxu0 0.0
  %985 = vmatpush1.msra.mxu0 %v883
  %986 = vmatprep.subr.mxu0 0.0
  %987 = vmatpush1.msra.mxu0 %v884
  %988 = vmatprep.subr.mxu0 0.0
  %989 = vmatpush1.msra.mxu0 0.0
  %990 = vmatprep.subr.mxu0 0.0
  %991 = vmatpush1.msra.mxu0 0.0
  %992 = vmatprep.subr.mxu0 0.0
  %993 = vmatpush1.msra.mxu0 0.0
  %994 = vmatprep.subr.mxu0 0.0
  %995 = vmatpush1.msra.mxu0 0.0
  %996 = vmatprep.subr.mxu0 0.0
  %997 = vmatpush1.msra.mxu0 0.0
  %998 = vmatprep.subr.mxu0 0.0
  %999 = vmatpush1.msra.mxu0 0.0
  %1000 = vmatprep.subr.mxu0 0.0
  %1001 = vmatpush1.msra.mxu0 0.0
  %1002 = vmatprep.subr.mxu0 0.0
  %1003 = vmatpush1.msra.mxu0 0.0
  %1004 = vmatprep.subr.mxu0 0.0
  %1005 = vmatpush1.msra.mxu0 0.0
  %1006 = vmatprep.subr.mxu0 0.0
  %1007 = vmatpush1.msra.mxu0 0.0
  %1008 = vmatprep.subr.mxu0 0.0
  %1009 = vmatpush1.msra.mxu0 0.0
  %1010 = vmatprep.subr.mxu0 0.0
  %1011 = vmatpush1.msra.mxu0 0.0
  %1012 = vmatprep.subr.mxu0 0.0
  %1013 = vmatpush1.msra.mxu0 0.0
  %1014 = vmatprep.subr.mxu0 0.0
  %1015 = vmatpush1.msra.mxu0 0.0
  %1016 = vmatprep.subr.mxu0 0.0
  %1017 = vmatpush1.msra.mxu0 0.0
  %1018 = vmatprep.subr.mxu0 0.0
  %1019 = vmatpush1.msra.mxu0 0.0
  %1020 = vmatprep.subr.mxu0 0.0
  %1021 = vmatpush1.msra.mxu0 0.0
  %1022 = vmatprep.subr.mxu0 0.0
  %1023 = vmatpush1.msra.mxu0 0.0
  %1024 = vmatprep.subr.mxu0 0.0
  %1025 = vmatpush1.msra.mxu0 0.0
  %1026 = vmatprep.subr.mxu0 0.0
  %1027 = vmatpush1.msra.mxu0 0.0
  %1028 = vmatprep.subr.mxu0 0.0
  %1029 = vmatpush1.msra.mxu0 0.0
  %1030 = vmatprep.subr.mxu0 0.0
  %1031 = vmatpush1.msra.mxu0 0.0
  %1032 = vmatprep.subr.mxu0 0.0
  %1033 = vmatpush1.msra.mxu0 0.0
  %1034 = vmatprep.subr.mxu0 0.0
  %1035 = vmatpush1.msra.mxu0 0.0
  %1036 = vmatprep.subr.mxu0 0.0
  %1037 = vmatpush1.msra.mxu0 0.0
  %1038 = vmatprep.subr.mxu0 0.0
  %1039 = vmatpush1.msra.mxu0 0.0
  %1040 = vmatprep.subr.mxu0 0.0
  %1041 = vmatpush1.msra.mxu0 0.0
  %1042 = vmatprep.subr.mxu0 0.0
  %1043 = vmatpush1.msra.mxu0 0.0
  %1044 = vmatprep.mubr.f32.mxu0 0.0
  %1045 = vmatmul.mubr.f32.gmra.mrb[0].mxu0 %v978
  %v1046 = vpop.f32.mrb[0].mxu0
  %v1047 = vadd.f32 %v976, %v1046
  %v1048 = vpop.f32.mrb[0].mxu0
  %1049 = vdwg.mxu0
  %v1050 = vadd.f32 %v45, %v1047
  %s1051 = scalar_lea.vmem %s8, 32
  %v1052 = vld [vmem:[%s1051] sm:$0xff]
  %v1053 = vld [vmem:[%s1051 + $0x8] sm:$0xff]
  %v1054 = vld [vmem:[%s1051 + $0x10] sm:$0xff]
  %v1055 = vld [vmem:[%s1051 + $0x18] sm:$0xff]
  %v1057 = vsel %vm58, %v1050, 0
  %1059 = vmatprep.subr.mxu0 0.0
  %1060 = vmatpush1.msra.mxu0 %v1052
  %1061 = vmatprep.subr.mxu0 0.0
  %1062 = vmatpush1.msra.mxu0 %v1053
  %1063 = vmatprep.subr.mxu0 0.0
  %1064 = vmatpush1.msra.mxu0 %v1054
  %1065 = vmatprep.subr.mxu0 0.0
  %1066 = vmatpush1.msra.mxu0 %v1055
  %1067 = vmatprep.subr.mxu0 0.0
  %1068 = vmatpush1.msra.mxu0 0.0
  %1069 = vmatprep.subr.mxu0 0.0
  %1070 = vmatpush1.msra.mxu0 0.0
  %1071 = vmatprep.subr.mxu0 0.0
  %1072 = vmatpush1.msra.mxu0 0.0
  %1073 = vmatprep.subr.mxu0 0.0
  %1074 = vmatpush1.msra.mxu0 0.0
  %1075 = vmatprep.subr.mxu0 0.0
  %1076 = vmatpush1.msra.mxu0 0.0
  %1077 = vmatprep.subr.mxu0 0.0
  %1078 = vmatpush1.msra.mxu0 0.0
  %1079 = vmatprep.subr.mxu0 0.0
  %1080 = vmatpush1.msra.mxu0 0.0
  %1081 = vmatprep.subr.mxu0 0.0
  %1082 = vmatpush1.msra.mxu0 0.0
  %1083 = vmatprep.subr.mxu0 0.0
  %1084 = vmatpush1.msra.mxu0 0.0
  %1085 = vmatprep.subr.mxu0 0.0
  %1086 = vmatpush1.msra.mxu0 0.0
  %1087 = vmatprep.subr.mxu0 0.0
  %1088 = vmatpush1.msra.mxu0 0.0
  %1089 = vmatprep.subr.mxu0 0.0
  %1090 = vmatpush1.msra.mxu0 0.0
  %1091 = vmatprep.subr.mxu0 0.0
  %1092 = vmatpush1.msra.mxu0 0.0
  %1093 = vmatprep.subr.mxu0 0.0
  %1094 = vmatpush1.msra.mxu0 0.0
  %1095 = vmatprep.subr.mxu0 0.0
  %1096 = vmatpush1.msra.mxu0 0.0
  %1097 = vmatprep.subr.mxu0 0.0
  %1098 = vmatpush1.msra.mxu0 0.0
  %1099 = vmatprep.subr.mxu0 0.0
  %1100 = vmatpush1.msra.mxu0 0.0
  %1101 = vmatprep.subr.mxu0 0.0
  %1102 = vmatpush1.msra.mxu0 0.0
  %1103 = vmatprep.subr.mxu0 0.0
  %1104 = vmatpush1.msra.mxu0 0.0
  %1105 = vmatprep.subr.mxu0 0.0
  %1106 = vmatpush1.msra.mxu0 0.0
  %1107 = vmatprep.subr.mxu0 0.0
  %1108 = vmatpush1.msra.mxu0 0.0
  %1109 = vmatprep.subr.mxu0 0.0
  %1110 = vmatpush1.msra.mxu0 0.0
  %1111 = vmatprep.subr.mxu0 0.0
  %1112 = vmatpush1.msra.mxu0 0.0
  %1113 = vmatprep.subr.mxu0 0.0
  %1114 = vmatpush1.msra.mxu0 0.0
  %1115 = vmatprep.subr.mxu0 0.0
  %1116 = vmatpush1.msra.mxu0 0.0
  %1117 = vmatprep.subr.mxu0 0.0
  %1118 = vmatpush1.msra.mxu0 0.0
  %1119 = vmatprep.subr.mxu0 0.0
  %1120 = vmatpush1.msra.mxu0 0.0
  %1121 = vmatprep.subr.mxu0 0.0
  %1122 = vmatpush1.msra.mxu0 0.0
  %1123 = vmatprep.mubr.f32.mxu0 0.0
  %1124 = vmatmul.mubr.f32.gmra.mrb[0].mxu0 %v1057
  %v1125 = vpop.f32.mrb[0].mxu0
  %v1126 = vadd.f32 0.0, %v1125
  %v1127 = vpop.f32.mrb[0].mxu0
  %1128 = vdwg.mxu0
  %v1130 = vsel %vm132, %v717, 0
  %1132 = vmatprep.subr.mxu0 0.0
  %1133 = vmatpush1.msra.mxu0 %v138
  %1134 = vmatprep.subr.mxu0 0.0
  %1135 = vmatpush1.msra.mxu0 0.0
  %1136 = vmatprep.subr.mxu0 0.0
  %1137 = vmatpush1.msra.mxu0 0.0
  %1138 = vmatprep.subr.mxu0 0.0
  %1139 = vmatpush1.msra.mxu0 0.0
  %1140 = vmatprep.subr.mxu0 0.0
  %1141 = vmatpush1.msra.mxu0 0.0
  %1142 = vmatprep.subr.mxu0 0.0
  %1143 = vmatpush1.msra.mxu0 0.0
  %1144 = vmatprep.subr.mxu0 0.0
  %1145 = vmatpush1.msra.mxu0 0.0
  %1146 = vmatprep.subr.mxu0 0.0
  %1147 = vmatpush1.msra.mxu0 0.0
  %1148 = vmatprep.subr.mxu0 0.0
  %1149 = vmatpush1.msra.mxu0 0.0
  %1150 = vmatprep.subr.mxu0 0.0
  %1151 = vmatpush1.msra.mxu0 0.0
  %1152 = vmatprep.subr.mxu0 0.0
  %1153 = vmatpush1.msra.mxu0 0.0
  %1154 = vmatprep.subr.mxu0 0.0
  %1155 = vmatpush1.msra.mxu0 0.0
  %1156 = vmatprep.subr.mxu0 0.0
  %1157 = vmatpush1.msra.mxu0 0.0
  %1158 = vmatprep.subr.mxu0 0.0
  %1159 = vmatpush1.msra.mxu0 0.0
  %1160 = vmatprep.subr.mxu0 0.0
  %1161 = vmatpush1.msra.mxu0 0.0
  %1162 = vmatprep.subr.mxu0 0.0
  %1163 = vmatpush1.msra.mxu0 0.0
  %1164 = vmatprep.subr.mxu0 0.0
  %1165 = vmatpush1.msra.mxu0 0.0
  %1166 = vmatprep.subr.mxu0 0.0
  %1167 = vmatpush1.msra.mxu0 0.0
  %1168 = vmatprep.subr.mxu0 0.0
  %1169 = vmatpush1.msra.mxu0 0.0
  %1170 = vmatprep.subr.mxu0 0.0
  %1171 = vmatpush1.msra.mxu0 0.0
  %1172 = vmatprep.subr.mxu0 0.0
  %1173 = vmatpush1.msra.mxu0 0.0
  %1174 = vmatprep.subr.mxu0 0.0
  %1175 = vmatpush1.msra.mxu0 0.0
  %1176 = vmatprep.subr.mxu0 0.0
  %1177 = vmatpush1.msra.mxu0 0.0
  %1178 = vmatprep.subr.mxu0 0.0
  %1179 = vmatpush1.msra.mxu0 0.0
  %1180 = vmatprep.subr.mxu0 0.0
  %1181 = vmatpush1.msra.mxu0 0.0
  %1182 = vmatprep.subr.mxu0 0.0
  %1183 = vmatpush1.msra.mxu0 0.0
  %1184 = vmatprep.subr.mxu0 0.0
  %1185 = vmatpush1.msra.mxu0 0.0
  %1186 = vmatprep.subr.mxu0 0.0
  %1187 = vmatpush1.msra.mxu0 0.0
  %1188 = vmatprep.subr.mxu0 0.0
  %1189 = vmatpush1.msra.mxu0 0.0
  %1190 = vmatprep.subr.mxu0 0.0
  %1191 = vmatpush1.msra.mxu0 0.0
  %1192 = vmatprep.subr.mxu0 0.0
  %1193 = vmatpush1.msra.mxu0 0.0
  %1194 = vmatprep.subr.mxu0 0.0
  %1195 = vmatpush1.msra.mxu0 0.0
  %1196 = vmatprep.mubr.f32.mxu0 0.0
  %1197 = vmatmul.mubr.f32.gmra.mrb[0].mxu0 %v1130
  %v1198 = vpop.f32.mrb[0].mxu0
  %v1199 = vadd.f32 %v1126, %v1198
  %v1200 = vpop.f32.mrb[0].mxu0
  %1201 = vdwg.mxu0
  %v1202 = vpack.c.bf16 %v1199, %v1199
  %v1204 = vsel %vm228, %v1202, 0
  %1206 = vmatprep.subr.bf16.mxu0 0
  %1207 = vmatpush1.bf16.msra.mxu0 %v1204
  %1208 = vmatprep.subr.bf16.mxu0 0
  %1209 = vmatpush1.bf16.msra.mxu0 0
  %1210 = vmatprep.subr.bf16.mxu0 0
  %1211 = vmatpush1.bf16.msra.mxu0 0
  %1212 = vmatprep.subr.bf16.mxu0 0
  %1213 = vmatpush1.bf16.msra.mxu0 0
  %1214 = vmatprep.subr.bf16.mxu0 0
  %1215 = vmatpush1.bf16.msra.mxu0 0
  %1216 = vmatprep.subr.bf16.mxu0 0
  %1217 = vmatpush1.bf16.msra.mxu0 0
  %1218 = vmatprep.subr.bf16.mxu0 0
  %1219 = vmatpush1.bf16.msra.mxu0 0
  %1220 = vmatprep.subr.bf16.mxu0 0
  %1221 = vmatpush1.bf16.msra.mxu0 0
  %1222 = vmatprep.subr.bf16.mxu0 0
  %1223 = vmatpush1.bf16.msra.mxu0 0
  %1224 = vmatprep.subr.bf16.mxu0 0
  %1225 = vmatpush1.bf16.msra.mxu0 0
  %1226 = vmatprep.subr.bf16.mxu0 0
  %1227 = vmatpush1.bf16.msra.mxu0 0
  %1228 = vmatprep.subr.bf16.mxu0 0
  %1229 = vmatpush1.bf16.msra.mxu0 0
  %1230 = vmatprep.subr.bf16.mxu0 0
  %1231 = vmatpush1.bf16.msra.mxu0 0
  %1232 = vmatprep.subr.bf16.mxu0 0
  %1233 = vmatpush1.bf16.msra.mxu0 0
  %1234 = vmatprep.subr.bf16.mxu0 0
  %1235 = vmatpush1.bf16.msra.mxu0 0
  %1236 = vmatprep.subr.bf16.mxu0 0
  %1237 = vmatpush1.bf16.msra.mxu0 0
  %1238 = vmatprep.mubr.bf16.mxu0 0
  %1239 = vmatmul.mubr.bf16.gmra.mrb[0].mxu0 %v223
  %v1240 = vpop.f32.mrb[0].mxu0
  %v1241 = vadd.f32 0.0, %v1240
  %v1242 = vpop.f32.mrb[0].mxu0
  %v1243 = vpop.f32.mrb[0].mxu0
  %v1244 = vadd.f32 0.0, %v1243
  %v1245 = vpop.f32.mrb[0].mxu0
  %1246 = vmatprep.mubr.bf16.mxu0 0
  %1247 = vmatmul.mubr.bf16.gmra.mrb[0].mxu0 %v226
  %v1248 = vpop.f32.mrb[0].mxu0
  %v1249 = vadd.f32 0.0, %v1248
  %v1250 = vpop.f32.mrb[0].mxu0
  %v1251 = vpop.f32.mrb[0].mxu0
  %v1252 = vadd.f32 0.0, %v1251
  %v1253 = vpop.f32.mrb[0].mxu0
  %1254 = vdwg.mxu0
  %s1255 = scalar_lea.vmem %s9, 24
  %v1256 = vld [vmem:[%s1255] sm:$0xff]
  %v1257 = vld [vmem:[%s1255 + $0x8] sm:$0xff]
  %v1258 = vld [vmem:[%s1255 + $0x10] sm:$0x1]
  %v1259 = vlaneseq
  %v1260 = vshrl.u32 %v1259, 7
  %v1261 = vsub.s32 0, %v1260
  %v1262 = vrot.slane %v1258, %v1261
  %1263 = vmatprep.subr.mxu0 0.0
  %1264 = vmatpush1.msra.mxu0 %v1256
  %1265 = vmatprep.subr.mxu0 0.0
  %1266 = vmatpush1.msra.mxu0 %v1257
  %1267 = vmatprep.subr.mxu0 0.0
  %1268 = vmatpush1.msra.mxu0 0.0
  %1269 = vmatprep.subr.mxu0 0.0
  %1270 = vmatpush1.msra.mxu0 0.0
  %1271 = vmatprep.subr.mxu0 0.0
  %1272 = vmatpush1.msra.mxu0 0.0
  %1273 = vmatprep.subr.mxu0 0.0
  %1274 = vmatpush1.msra.mxu0 0.0
  %1275 = vmatprep.subr.mxu0 0.0
  %1276 = vmatpush1.msra.mxu0 0.0
  %1277 = vmatprep.subr.mxu0 0.0
  %1278 = vmatpush1.msra.mxu0 0.0
  %1279 = vmatprep.subr.mxu0 0.0
  %1280 = vmatpush1.msra.mxu0 0.0
  %1281 = vmatprep.subr.mxu0 0.0
  %1282 = vmatpush1.msra.mxu0 0.0
  %1283 = vmatprep.subr.mxu0 0.0
  %1284 = vmatpush1.msra.mxu0 0.0
  %1285 = vmatprep.subr.mxu0 0.0
  %1286 = vmatpush1.msra.mxu0 0.0
  %1287 = vmatprep.subr.mxu0 0.0
  %1288 = vmatpush1.msra.mxu0 0.0
  %1289 = vmatprep.subr.mxu0 0.0
  %1290 = vmatpush1.msra.mxu0 0.0
  %1291 = vmatprep.subr.mxu0 0.0
  %1292 = vmatpush1.msra.mxu0 0.0
  %1293 = vmatprep.subr.mxu0 0.0
  %1294 = vmatpush1.msra.mxu0 0.0
  %1295 = vmatprep.subr.mxu0 0.0
  %1296 = vmatpush1.msra.mxu0 0.0
  %1297 = vmatprep.subr.mxu0 0.0
  %1298 = vmatpush1.msra.mxu0 0.0
  %1299 = vmatprep.subr.mxu0 0.0
  %1300 = vmatpush1.msra.mxu0 0.0
  %1301 = vmatprep.subr.mxu0 0.0
  %1302 = vmatpush1.msra.mxu0 0.0
  %1303 = vmatprep.subr.mxu0 0.0
  %1304 = vmatpush1.msra.mxu0 0.0
  %1305 = vmatprep.subr.mxu0 0.0
  %1306 = vmatpush1.msra.mxu0 0.0
  %1307 = vmatprep.subr.mxu0 0.0
  %1308 = vmatpush1.msra.mxu0 0.0
  %1309 = vmatprep.subr.mxu0 0.0
  %1310 = vmatpush1.msra.mxu0 0.0
  %1311 = vmatprep.subr.mxu0 0.0
  %1312 = vmatpush1.msra.mxu0 0.0
  %1313 = vmatprep.subr.mxu0 0.0
  %1314 = vmatpush1.msra.mxu0 0.0
  %1315 = vmatprep.subr.mxu0 0.0
  %1316 = vmatpush1.msra.mxu0 0.0
  %1317 = vmatprep.subr.mxu0 0.0
  %1318 = vmatpush1.msra.mxu0 0.0
  %1319 = vmatprep.subr.mxu0 0.0
  %1320 = vmatpush1.msra.mxu0 0.0
  %1321 = vmatprep.subr.mxu0 0.0
  %1322 = vmatpush1.msra.mxu0 0.0
  %1323 = vmatprep.subr.mxu0 0.0
  %1324 = vmatpush1.msra.mxu0 0.0
  %1325 = vmatprep.subr.mxu0 0.0
  %1326 = vmatpush1.msra.mxu0 0.0
  %1327 = vmatprep.mubr.f32.mxu0 0.0
  %1328 = vmatmul.mubr.f32.gmra.mrb[0].mxu0 %v551
  %v1329 = vpop.f32.mrb[0].mxu0
  %v1330 = vadd.f32 %v1262, %v1329
  %v1331 = vpop.f32.mrb[0].mxu0
  %1332 = vmatprep.mubr.f32.mxu0 0.0
  %1333 = vmatmul.mubr.f32.gmra.mrb[0].mxu0 %v554
  %v1334 = vpop.f32.mrb[0].mxu0
  %v1335 = vadd.f32 %v1262, %v1334
  %v1336 = vpop.f32.mrb[0].mxu0
  %1337 = vdwg.mxu0
  %1340 = vrot.lane.b32.xlu0 %v1241, 125
  %v1341 = vpop.permute.xlu0 %1340
  %1342 = vrot.lane.b32.xlu0 %v1244, 125
  %v1343 = vpop.permute.xlu0 %1342
  %v1346 = vadd.f32 %v1330, %v1341
  %v1347 = vadd.f32 %v1335, %v1343
  %1350 = vrot.lane.b32.xlu0 %v1249, 124
  %v1351 = vpop.permute.xlu0 %1350
  %1352 = vrot.lane.b32.xlu0 %v1252, 124
  %v1353 = vpop.permute.xlu0 %1352
  %v1356 = vadd.f32 %v1346, %v1351
  %v1357 = vadd.f32 %v1347, %v1353
  %v1358 = vsub.f32 %v1241, %v1249
  %v1359 = vsub.f32 %v1244, %v1252
  %1361 = vset.pattern.permute.xlu0 32
  %1362 = vperm.xlu0 %1361, %v1356
  %v1363 = vpop.permute.xlu0 %1362
  %1366 = vset.pattern.permute.xlu0 32
  %1367 = vperm.xlu0 %1366, %v1357
  %v1368 = vpop.permute.xlu0 %1367
  %v1370 = vmul.f32 %v1358, %v1363
  %v1371 = vmul.f32 %v1359, %v1368
  %v1372 = vpack.c.bf16 %v1371, %v1370
  %1374 = vrot.lane.b32.xlu0 %v1372, 96
  %v1375 = vpop.permute.xlu0 %1374
  %1377 = vmatprep.subr.bf16.mxu0 0
  %1378 = vmatpush1.bf16.msra.mxu0 %v1375
  %1379 = vmatprep.subr.bf16.mxu0 0
  %1380 = vmatpush1.bf16.msra.mxu0 0
  %1381 = vmatprep.subr.bf16.mxu0 0
  %1382 = vmatpush1.bf16.msra.mxu0 0
  %1383 = vmatprep.subr.bf16.mxu0 0
  %1384 = vmatpush1.bf16.msra.mxu0 0
  %1385 = vmatprep.subr.bf16.mxu0 0
  %1386 = vmatpush1.bf16.msra.mxu0 0
  %1387 = vmatprep.subr.bf16.mxu0 0
  %1388 = vmatpush1.bf16.msra.mxu0 0
  %1389 = vmatprep.subr.bf16.mxu0 0
  %1390 = vmatpush1.bf16.msra.mxu0 0
  %1391 = vmatprep.subr.bf16.mxu0 0
  %1392 = vmatpush1.bf16.msra.mxu0 0
  %1393 = vmatprep.subr.bf16.mxu0 0
  %1394 = vmatpush1.bf16.msra.mxu0 0
  %1395 = vmatprep.subr.bf16.mxu0 0
  %1396 = vmatpush1.bf16.msra.mxu0 0
  %1397 = vmatprep.subr.bf16.mxu0 0
  %1398 = vmatpush1.bf16.msra.mxu0 0
  %1399 = vmatprep.subr.bf16.mxu0 0
  %1400 = vmatpush1.bf16.msra.mxu0 0
  %1401 = vmatprep.subr.bf16.mxu0 0
  %1402 = vmatpush1.bf16.msra.mxu0 0
  %1403 = vmatprep.subr.bf16.mxu0 0
  %1404 = vmatpush1.bf16.msra.mxu0 0
  %1405 = vmatprep.subr.bf16.mxu0 0
  %1406 = vmatpush1.bf16.msra.mxu0 0
  %1407 = vmatprep.subr.bf16.mxu0 0
  %1408 = vmatpush1.bf16.msra.mxu0 0
  %1409 = vmatprep.mubr.bf16.mxu0 0
  %1410 = vmatmul.mubr.bf16.gmra.mrb[0].mxu0 %v669
  %v1411 = vpop.f32.mrb[0].mxu0
  %v1412 = vadd.f32 0.0, %v1411
  %v1413 = vpop.f32.mrb[0].mxu0
  %v1414 = vpop.f32.mrb[0].mxu0
  %v1415 = vpop.f32.mrb[0].mxu0
  %1416 = vdwg.mxu0
  %v1417 = vmul.f32 %v1412, %v714
  %v1418 = vadd.f32 %v717, %v1417
  %s1419 = scalar_lea.vmem %s10, 40
  %v1420 = vld [vmem:[%s1419] sm:$0xff]
  %v1421 = vld [vmem:[%s1419 + $0x8] sm:$0xff]
  %v1422 = vld [vmem:[%s1419 + $0x10] sm:$0xff]
  %v1423 = vld [vmem:[%s1419 + $0x18] sm:$0xff]
  %v1424 = vld [vmem:[%s1419 + $0x20] sm:$0x1]
  %v1425 = vmax.f32 %v1330, 0.0
  %v1426 = vmax.f32 %v1335, 0.0
  %v1427 = vand.u32 2147483647, %v1330
  %v1428 = vand.u32 2147483647, %v1335
  %v1429 = vsub.f32 0.0, %v1427
  %v1430 = vsub.f32 0.0, %v1428
  %v1431 = vmul.f32 %v1429, 1.442695
  %v1432 = vpow.pop %v1431
  %v1433 = vmul.f32 %v1430, 1.442695
  %v1434 = vpow.pop %v1433
  %v1435 = vadd.f32 %v1432, 1.0
  %v1436 = vadd.f32 %v1434, 1.0
  %v1437 = vlog2.pop %v1435
  %v1438 = vmul.f32 %v1437, 0.6931472
  %v1439 = vlog2.pop %v1436
  %v1440 = vmul.f32 %v1439, 0.6931472
  %v1441 = vadd.f32 %v1425, %v1438
  %v1442 = vadd.f32 %v1426, %v1440
  %v1443 = vsub.f32 %v1441, 0.6931472
  %v1444 = vsub.f32 %v1442, 0.6931472
  %v1445 = vlaneseq
  %v1446 = vshrl.u32 %v1445, 7
  %v1447 = vsub.s32 0, %v1446
  %v1448 = vrot.slane %v1424, %v1447
  %v1450 = vsel %vm58, %v1443, 0
  %v1453 = vsel %vm58, %v1444, 0
  %1455 = vmatprep.subr.mxu0 0.0
  %1456 = vmatpush1.msra.mxu0 %v1420
  %1457 = vmatprep.subr.mxu0 0.0
  %1458 = vmatpush1.msra.mxu0 %v1421
  %1459 = vmatprep.subr.mxu0 0.0
  %1460 = vmatpush1.msra.mxu0 %v1422
  %1461 = vmatprep.subr.mxu0 0.0
  %1462 = vmatpush1.msra.mxu0 %v1423
  %1463 = vmatprep.subr.mxu0 0.0
  %1464 = vmatpush1.msra.mxu0 0.0
  %1465 = vmatprep.subr.mxu0 0.0
  %1466 = vmatpush1.msra.mxu0 0.0
  %1467 = vmatprep.subr.mxu0 0.0
  %1468 = vmatpush1.msra.mxu0 0.0
  %1469 = vmatprep.subr.mxu0 0.0
  %1470 = vmatpush1.msra.mxu0 0.0
  %1471 = vmatprep.subr.mxu0 0.0
  %1472 = vmatpush1.msra.mxu0 0.0
  %1473 = vmatprep.subr.mxu0 0.0
  %1474 = vmatpush1.msra.mxu0 0.0
  %1475 = vmatprep.subr.mxu0 0.0
  %1476 = vmatpush1.msra.mxu0 0.0
  %1477 = vmatprep.subr.mxu0 0.0
  %1478 = vmatpush1.msra.mxu0 0.0
  %1479 = vmatprep.subr.mxu0 0.0
  %1480 = vmatpush1.msra.mxu0 0.0
  %1481 = vmatprep.subr.mxu0 0.0
  %1482 = vmatpush1.msra.mxu0 0.0
  %1483 = vmatprep.subr.mxu0 0.0
  %1484 = vmatpush1.msra.mxu0 0.0
  %1485 = vmatprep.subr.mxu0 0.0
  %1486 = vmatpush1.msra.mxu0 0.0
  %1487 = vmatprep.subr.mxu0 0.0
  %1488 = vmatpush1.msra.mxu0 0.0
  %1489 = vmatprep.subr.mxu0 0.0
  %1490 = vmatpush1.msra.mxu0 0.0
  %1491 = vmatprep.subr.mxu0 0.0
  %1492 = vmatpush1.msra.mxu0 0.0
  %1493 = vmatprep.subr.mxu0 0.0
  %1494 = vmatpush1.msra.mxu0 0.0
  %1495 = vmatprep.subr.mxu0 0.0
  %1496 = vmatpush1.msra.mxu0 0.0
  %1497 = vmatprep.subr.mxu0 0.0
  %1498 = vmatpush1.msra.mxu0 0.0
  %1499 = vmatprep.subr.mxu0 0.0
  %1500 = vmatpush1.msra.mxu0 0.0
  %1501 = vmatprep.subr.mxu0 0.0
  %1502 = vmatpush1.msra.mxu0 0.0
  %1503 = vmatprep.subr.mxu0 0.0
  %1504 = vmatpush1.msra.mxu0 0.0
  %1505 = vmatprep.subr.mxu0 0.0
  %1506 = vmatpush1.msra.mxu0 0.0
  %1507 = vmatprep.subr.mxu0 0.0
  %1508 = vmatpush1.msra.mxu0 0.0
  %1509 = vmatprep.subr.mxu0 0.0
  %1510 = vmatpush1.msra.mxu0 0.0
  %1511 = vmatprep.subr.mxu0 0.0
  %1512 = vmatpush1.msra.mxu0 0.0
  %1513 = vmatprep.subr.mxu0 0.0
  %1514 = vmatpush1.msra.mxu0 0.0
  %1515 = vmatprep.subr.mxu0 0.0
  %1516 = vmatpush1.msra.mxu0 0.0
  %1517 = vmatprep.subr.mxu0 0.0
  %1518 = vmatpush1.msra.mxu0 0.0
  %1519 = vmatprep.mubr.f32.mxu0 0.0
  %1520 = vmatmul.mubr.f32.gmra.mrb[0].mxu0 %v1450
  %v1521 = vpop.f32.mrb[0].mxu0
  %v1522 = vadd.f32 %v1448, %v1521
  %v1523 = vpop.f32.mrb[0].mxu0
  %1524 = vmatprep.mubr.f32.mxu0 0.0
  %1525 = vmatmul.mubr.f32.gmra.mrb[0].mxu0 %v1453
  %v1526 = vpop.f32.mrb[0].mxu0
  %v1527 = vadd.f32 %v1448, %v1526
  %v1528 = vpop.f32.mrb[0].mxu0
  %1529 = vdwg.mxu0
  %v1530 = vmul.f32 %v1522, %v540
  %v1531 = vmul.f32 %v1527, %v541
  %v1532 = vmul.f32 %v1241, %v1530
  %v1533 = vmul.f32 %v1244, %v1531
  %v1534 = vpack.c.bf16 %v1533, %v1532
  %1535 = vmatprep.subr.bf16.mxu0 0
  %1536 = vmatpush1.bf16.msra.mxu0 %v1534
  %1537 = vmatprep.subr.bf16.mxu0 0
  %1538 = vmatpush1.bf16.msra.mxu0 0
  %1539 = vmatprep.subr.bf16.mxu0 0
  %1540 = vmatpush1.bf16.msra.mxu0 0
  %1541 = vmatprep.subr.bf16.mxu0 0
  %1542 = vmatpush1.bf16.msra.mxu0 0
  %1543 = vmatprep.subr.bf16.mxu0 0
  %1544 = vmatpush1.bf16.msra.mxu0 0
  %1545 = vmatprep.subr.bf16.mxu0 0
  %1546 = vmatpush1.bf16.msra.mxu0 0
  %1547 = vmatprep.subr.bf16.mxu0 0
  %1548 = vmatpush1.bf16.msra.mxu0 0
  %1549 = vmatprep.subr.bf16.mxu0 0
  %1550 = vmatpush1.bf16.msra.mxu0 0
  %1551 = vmatprep.subr.bf16.mxu0 0
  %1552 = vmatpush1.bf16.msra.mxu0 0
  %1553 = vmatprep.subr.bf16.mxu0 0
  %1554 = vmatpush1.bf16.msra.mxu0 0
  %1555 = vmatprep.subr.bf16.mxu0 0
  %1556 = vmatpush1.bf16.msra.mxu0 0
  %1557 = vmatprep.subr.bf16.mxu0 0
  %1558 = vmatpush1.bf16.msra.mxu0 0
  %1559 = vmatprep.subr.bf16.mxu0 0
  %1560 = vmatpush1.bf16.msra.mxu0 0
  %1561 = vmatprep.subr.bf16.mxu0 0
  %1562 = vmatpush1.bf16.msra.mxu0 0
  %1563 = vmatprep.subr.bf16.mxu0 0
  %1564 = vmatpush1.bf16.msra.mxu0 0
  %1565 = vmatprep.subr.bf16.mxu0 0
  %1566 = vmatpush1.bf16.msra.mxu0 0
  %1567 = vmatprep.mubr.bf16.mxu0 0
  %1568 = vmatmul.mubr.bf16.gmra.mrb[0].mxu0 %v834
  %v1569 = vpop.f32.mrb[0].mxu0
  %v1570 = vadd.f32 0.0, %v1569
  %v1571 = vpop.f32.mrb[0].mxu0
  %v1572 = vpop.f32.mrb[0].mxu0
  %v1573 = vpop.f32.mrb[0].mxu0
  %1574 = vdwg.mxu0
  %s1575 = scalar_lea.vmem %s11, 80
  %v1576 = vld [vmem:[%s1575] sm:$0xff]
  %v1577 = vld [vmem:[%s1575 + $0x8] sm:$0xff]
  %v1578 = vld [vmem:[%s1575 + $0x10] sm:$0xff]
  %v1579 = vld [vmem:[%s1575 + $0x18] sm:$0xff]
  %v1580 = vld [vmem:[%s1575 + $0x20] sm:$0xff]
  %v1581 = vld [vmem:[%s1575 + $0x28] sm:$0xff]
  %v1582 = vld [vmem:[%s1575 + $0x30] sm:$0xff]
  %v1583 = vld [vmem:[%s1575 + $0x38] sm:$0xff]
  %v1584 = vld [vmem:[%s1575 + $0x40] sm:$0xff]
  %v1585 = vld [vmem:[%s1575 + $0x48] sm:$0x1]
  %v1586 = vlaneseq
  %v1587 = vshrl.u32 %v1586, 7
  %v1588 = vsub.s32 0, %v1587
  %v1589 = vrot.slane %v1580, %v1588
  %v1591 = vsel %vm58, %v1570, 0
  %1593 = vmatprep.subr.mxu0 0.0
  %1594 = vmatpush1.msra.mxu0 %v1576
  %1595 = vmatprep.subr.mxu0 0.0
  %1596 = vmatpush1.msra.mxu0 %v1577
  %1597 = vmatprep.subr.mxu0 0.0
  %1598 = vmatpush1.msra.mxu0 %v1578
  %1599 = vmatprep.subr.mxu0 0.0
  %1600 = vmatpush1.msra.mxu0 %v1579
  %1601 = vmatprep.subr.mxu0 0.0
  %1602 = vmatpush1.msra.mxu0 0.0
  %1603 = vmatprep.subr.mxu0 0.0
  %1604 = vmatpush1.msra.mxu0 0.0
  %1605 = vmatprep.subr.mxu0 0.0
  %1606 = vmatpush1.msra.mxu0 0.0
  %1607 = vmatprep.subr.mxu0 0.0
  %1608 = vmatpush1.msra.mxu0 0.0
  %1609 = vmatprep.subr.mxu0 0.0
  %1610 = vmatpush1.msra.mxu0 0.0
  %1611 = vmatprep.subr.mxu0 0.0
  %1612 = vmatpush1.msra.mxu0 0.0
  %1613 = vmatprep.subr.mxu0 0.0
  %1614 = vmatpush1.msra.mxu0 0.0
  %1615 = vmatprep.subr.mxu0 0.0
  %1616 = vmatpush1.msra.mxu0 0.0
  %1617 = vmatprep.subr.mxu0 0.0
  %1618 = vmatpush1.msra.mxu0 0.0
  %1619 = vmatprep.subr.mxu0 0.0
  %1620 = vmatpush1.msra.mxu0 0.0
  %1621 = vmatprep.subr.mxu0 0.0
  %1622 = vmatpush1.msra.mxu0 0.0
  %1623 = vmatprep.subr.mxu0 0.0
  %1624 = vmatpush1.msra.mxu0 0.0
  %1625 = vmatprep.subr.mxu0 0.0
  %1626 = vmatpush1.msra.mxu0 0.0
  %1627 = vmatprep.subr.mxu0 0.0
  %1628 = vmatpush1.msra.mxu0 0.0
  %1629 = vmatprep.subr.mxu0 0.0
  %1630 = vmatpush1.msra.mxu0 0.0
  %1631 = vmatprep.subr.mxu0 0.0
  %1632 = vmatpush1.msra.mxu0 0.0
  %1633 = vmatprep.subr.mxu0 0.0
  %1634 = vmatpush1.msra.mxu0 0.0
  %1635 = vmatprep.subr.mxu0 0.0
  %1636 = vmatpush1.msra.mxu0 0.0
  %1637 = vmatprep.subr.mxu0 0.0
  %1638 = vmatpush1.msra.mxu0 0.0
  %1639 = vmatprep.subr.mxu0 0.0
  %1640 = vmatpush1.msra.mxu0 0.0
  %1641 = vmatprep.subr.mxu0 0.0
  %1642 = vmatpush1.msra.mxu0 0.0
  %1643 = vmatprep.subr.mxu0 0.0
  %1644 = vmatpush1.msra.mxu0 0.0
  %1645 = vmatprep.subr.mxu0 0.0
  %1646 = vmatpush1.msra.mxu0 0.0
  %1647 = vmatprep.subr.mxu0 0.0
  %1648 = vmatpush1.msra.mxu0 0.0
  %1649 = vmatprep.subr.mxu0 0.0
  %1650 = vmatpush1.msra.mxu0 0.0
  %1651 = vmatprep.subr.mxu0 0.0
  %1652 = vmatpush1.msra.mxu0 0.0
  %1653 = vmatprep.subr.mxu0 0.0
  %1654 = vmatpush1.msra.mxu0 0.0
  %1655 = vmatprep.subr.mxu0 0.0
  %1656 = vmatpush1.msra.mxu0 0.0
  %1657 = vmatprep.mubr.f32.mxu0 0.0
  %1658 = vmatmul.mubr.f32.gmra.mrb[0].mxu0 %v1591
  %v1659 = vpop.f32.mrb[0].mxu0
  %v1660 = vadd.f32 %v1589, %v1659
  %v1661 = vpop.f32.mrb[0].mxu0
  %1662 = vdwg.mxu0
  %v1663 = vmax.f32 %v1660, 0.0
  %v1664 = vand.u32 2147483647, %v1660
  %v1665 = vsub.f32 0.0, %v1664
  %v1666 = vmul.f32 %v1665, 1.442695
  %v1667 = vpow.pop %v1666
  %v1668 = vadd.f32 %v1667, 1.0
  %v1669 = vlog2.pop %v1668
  %v1670 = vmul.f32 %v1669, 0.6931472
  %v1671 = vadd.f32 %v1663, %v1670
  %v1672 = vsub.f32 %v1671, 0.6931472
  %v1673 = vlaneseq
  %v1674 = vshrl.u32 %v1673, 7
  %v1675 = vsub.s32 0, %v1674
  %v1676 = vrot.slane %v1585, %v1675
  %v1678 = vsel %vm58, %v1672, 0
  %1680 = vmatprep.subr.mxu0 0.0
  %1681 = vmatpush1.msra.mxu0 %v1581
  %1682 = vmatprep.subr.mxu0 0.0
  %1683 = vmatpush1.msra.mxu0 %v1582
  %1684 = vmatprep.subr.mxu0 0.0
  %1685 = vmatpush1.msra.mxu0 %v1583
  %1686 = vmatprep.subr.mxu0 0.0
  %1687 = vmatpush1.msra.mxu0 %v1584
  %1688 = vmatprep.subr.mxu0 0.0
  %1689 = vmatpush1.msra.mxu0 0.0
  %1690 = vmatprep.subr.mxu0 0.0
  %1691 = vmatpush1.msra.mxu0 0.0
  %1692 = vmatprep.subr.mxu0 0.0
  %1693 = vmatpush1.msra.mxu0 0.0
  %1694 = vmatprep.subr.mxu0 0.0
  %1695 = vmatpush1.msra.mxu0 0.0
  %1696 = vmatprep.subr.mxu0 0.0
  %1697 = vmatpush1.msra.mxu0 0.0
  %1698 = vmatprep.subr.mxu0 0.0
  %1699 = vmatpush1.msra.mxu0 0.0
  %1700 = vmatprep.subr.mxu0 0.0
  %1701 = vmatpush1.msra.mxu0 0.0
  %1702 = vmatprep.subr.mxu0 0.0
  %1703 = vmatpush1.msra.mxu0 0.0
  %1704 = vmatprep.subr.mxu0 0.0
  %1705 = vmatpush1.msra.mxu0 0.0
  %1706 = vmatprep.subr.mxu0 0.0
  %1707 = vmatpush1.msra.mxu0 0.0
  %1708 = vmatprep.subr.mxu0 0.0
  %1709 = vmatpush1.msra.mxu0 0.0
  %1710 = vmatprep.subr.mxu0 0.0
  %1711 = vmatpush1.msra.mxu0 0.0
  %1712 = vmatprep.subr.mxu0 0.0
  %1713 = vmatpush1.msra.mxu0 0.0
  %1714 = vmatprep.subr.mxu0 0.0
  %1715 = vmatpush1.msra.mxu0 0.0
  %1716 = vmatprep.subr.mxu0 0.0
  %1717 = vmatpush1.msra.mxu0 0.0
  %1718 = vmatprep.subr.mxu0 0.0
  %1719 = vmatpush1.msra.mxu0 0.0
  %1720 = vmatprep.subr.mxu0 0.0
  %1721 = vmatpush1.msra.mxu0 0.0
  %1722 = vmatprep.subr.mxu0 0.0
  %1723 = vmatpush1.msra.mxu0 0.0
  %1724 = vmatprep.subr.mxu0 0.0
  %1725 = vmatpush1.msra.mxu0 0.0
  %1726 = vmatprep.subr.mxu0 0.0
  %1727 = vmatpush1.msra.mxu0 0.0
  %1728 = vmatprep.subr.mxu0 0.0
  %1729 = vmatpush1.msra.mxu0 0.0
  %1730 = vmatprep.subr.mxu0 0.0
  %1731 = vmatpush1.msra.mxu0 0.0
  %1732 = vmatprep.subr.mxu0 0.0
  %1733 = vmatpush1.msra.mxu0 0.0
  %1734 = vmatprep.subr.mxu0 0.0
  %1735 = vmatpush1.msra.mxu0 0.0
  %1736 = vmatprep.subr.mxu0 0.0
  %1737 = vmatpush1.msra.mxu0 0.0
  %1738 = vmatprep.subr.mxu0 0.0
  %1739 = vmatpush1.msra.mxu0 0.0
  %1740 = vmatprep.subr.mxu0 0.0
  %1741 = vmatpush1.msra.mxu0 0.0
  %1742 = vmatprep.subr.mxu0 0.0
  %1743 = vmatpush1.msra.mxu0 0.0
  %1744 = vmatprep.mubr.f32.mxu0 0.0
  %1745 = vmatmul.mubr.f32.gmra.mrb[0].mxu0 %v1678
  %v1746 = vpop.f32.mrb[0].mxu0
  %v1747 = vadd.f32 %v1676, %v1746
  %v1748 = vpop.f32.mrb[0].mxu0
  %1749 = vdwg.mxu0
  %v1750 = vadd.f32 %v1050, %v1747
  %1751 = vst.msk [vmem:[%s12] sm:$0xff] %vm132, %v1418
  %1752 = vst.msk [vmem:[%s13] sm:$0xff] %vm58, %v1750
  // Predicated region
  $region50: #{tpu_custom_call.1} parent=0 // pred_check
    _
  $region51: #{tpu_custom_call.1} parent=0 // pred_check_branch
    %1754 = sbr.rel (0) target = $region53
  $region52: #{tpu_custom_call.1} parent=0 // pred_region
    _
  $region53: #{tpu_custom_call.1} parent=0 // pred_fallthru
    _
  // Predicated region
  $region54: #{tpu_custom_call.1} parent=0 // pred_check
    _
  $region55: #{tpu_custom_call.1} parent=0 // pred_check_branch
    %1756 = sbr.rel (0) target = $region57
  $region56: #{tpu_custom_call.1} parent=0 // pred_region
    _
  $region57: #{tpu_custom_call.1} parent=0 // pred_fallthru
    _
  // Predicated region
  $region58: #{tpu_custom_call.1} parent=0 // pred_check
    _
  $region59: #{tpu_custom_call.1} parent=0 // pred_check_branch
    %1758 = sbr.rel (0) target = $region61
  $region60: #{tpu_custom_call.1} parent=0 // pred_region
    _
  $region61: #{tpu_custom_call.1} parent=0 // pred_fallthru
    _
  // Predicated region
  $region62: #{tpu_custom_call.1} parent=0 // pred_check
    _
  $region63: #{tpu_custom_call.1} parent=0 // pred_check_branch
    %1760 = sbr.rel (0) target = $region65
  $region64: #{tpu_custom_call.1} parent=0 // pred_region
    _
  $region65: #{tpu_custom_call.1} parent=0 // pred_fallthru
    _

</llo_original>
